<compile_context>
chip_gen: v5e
topology: v5e:2x2
jax: 0.10.0
libtpu: 0.0.40
codegen_flags: <defaults>
</compile_context>

<pallas_src>
from functools import partial

import jax
import jax.numpy as jnp
from jax import lax
from jax.experimental import pallas as pl
from jax.experimental.pallas import tpu as pltpu


# ---------------------------------------------------------------------------
# Pass 1: fused q/k projection (two 1x1 convs as one C -> 2C matmul) + per-image
# per-channel max/min of x (used by the final max-pool without re-reading x).
# ---------------------------------------------------------------------------
def _project_kernel(C, x_ref, wqk_ref, bqk_ref, q_ref, k_ref, xmax_ref, xmin_ref):
    x = x_ref[0]                                                        # (HW, C) f32
    y = jnp.dot(x.astype(jnp.bfloat16), wqk_ref[...],
                preferred_element_type=jnp.float32)
    y = y + bqk_ref[...]                                                # (HW, 2C) f32
    q_ref[0] = y[:, :C].astype(jnp.bfloat16)
    k_ref[0] = y[:, C:].astype(jnp.bfloat16)
    xmax_ref[0] = jnp.max(x, axis=0, keepdims=True)                     # (1, C)
    xmin_ref[0] = jnp.min(x, axis=0, keepdims=True)                     # (1, C)


# ---------------------------------------------------------------------------
# Pass 2: co-attention.  grid = (query image a, key image b); b is the streamed
# reduction axis.  Only one (HW, HW) affinity tile ever lives in VMEM.
# On the last key step: per-image softmax, then the attention-weighted feature
# sum attn^T @ x -> (1, C) partial (conv6 is deferred to pass 3 by linearity).
# ---------------------------------------------------------------------------
def _coatt_kernel(w_scale, k_resident, q_ref, k_ref, x_ref, part_ref, wsum_ref):
    b = pl.program_id(1)
    kb = k_ref[b] if k_resident else k_ref[0]                           # (HW, C) bf16

    # S tile for (query image a, key image b); NT matmul — no explicit k.T.
    s = lax.dot_general(q_ref[0], kb,
                        dimension_numbers=(((1,), (1,)), ((), ())),
                        preferred_element_type=jnp.float32)             # (HW, HW)

    @pl.when(b == 0)
    def _():
        wsum_ref[...] = jnp.zeros_like(wsum_ref)

    # Online per-key-image max over key positions, summed over key images.
    wsum_ref[...] = wsum_ref[...] + jnp.max(s, axis=-1, keepdims=True)  # (HW, 1)

    @pl.when(b == pl.num_programs(1) - 1)
    def _():
        # Per-image softmax over the HW query positions (f32 throughout).
        w = wsum_ref[...] * w_scale
        w = w - jnp.max(w, axis=0, keepdims=True)
        e = jnp.exp(w)
        attn = e * pl.reciprocal(jnp.sum(e, axis=0, keepdims=True), approx=True)
        # Attention-weighted feature sum for this image: attn^T @ x  (f32).
        part_ref[0] = jnp.sum(x_ref[0] * attn, axis=0, keepdims=True)   # (1, C)


# ---------------------------------------------------------------------------
# Pass 3: consensus prototype (tiny conv6 application) + AdaptiveMaxPool2d(1)
# via the per-channel max/min trick — no re-read of x from HBM.
# ---------------------------------------------------------------------------
def _finalize_kernel(inv_bhw, psum_ref, xmax_ref, xmin_ref, w6t_ref, b6_ref,
                     out_ref):
    p = jnp.sum(psum_ref[...], axis=0) * inv_bhw                        # (1, C) f32
    p8 = jnp.broadcast_to(p, (8, p.shape[-1]))                          # sublane bcast
    y8 = jnp.dot(p8, w6t_ref[...], preferred_element_type=jnp.float32)  # (8, C)
    proto = y8[0:1, :] + b6_ref[...]                                    # (1, C)
    # max_hw(x * proto) per channel == proto>=0 ? proto*max(x) : proto*min(x)
    out_ref[0] = jnp.where(proto >= 0.0,
                           proto * xmax_ref[0], proto * xmin_ref[0])    # (1, C)


def context_extractor2(x_nchw, params):
    """x_nchw: (B, C, H, W) float32. Returns (B, C, 1, 1) like the PyTorch module."""
    wq, bq, wk, bk, w6, b6 = params
    B, C, H, W = x_nchw.shape
    HW = H * W
    assert HW % 8 == 0, "H*W must be a multiple of 8 (TPU sublane)"
    assert C % 128 == 0, "channels must be a multiple of 128 (TPU lane)"
    scale = 1.0 / (C ** 0.5)
    f32, bf16 = jnp.float32, jnp.bfloat16

    # NCHW -> (B, HW, C) channels-last (layout glue outside the kernels).
    x = jnp.transpose(x_nchw, (0, 2, 3, 1)).reshape(B, HW, C).astype(f32)

    # Fused / pre-transposed weights so every 1x1 conv is a plain X @ W matmul.
    wqk = jnp.concatenate([wq.T, wk.T], axis=1).astype(bf16)            # (C, 2C)
    bqk = jnp.concatenate([bq, bk]).reshape(1, 2 * C).astype(f32)
    w6t = w6.T.astype(f32)                                              # (C, C) tiny use
    b6r = b6.reshape(1, C).astype(f32)

    def cparams(sem):
        return pltpu.CompilerParams(dimension_semantics=sem,
                                    vmem_limit_bytes=32 * 1024 * 1024)

    def img_block(index_map):
        return pl.BlockSpec((1, HW, C), index_map)

    # ---- pass 1: fused q/k projection + per-image channel max/min ----------
    q, k, xmax, xmin = pl.pallas_call(
        partial(_project_kernel, C),
        out_shape=(jax.ShapeDtypeStruct((B, HW, C), bf16),
                   jax.ShapeDtypeStruct((B, HW, C), bf16),
                   jax.ShapeDtypeStruct((B, 1, C), f32),
                   jax.ShapeDtypeStruct((B, 1, C), f32)),
        grid=(B,),
        in_specs=[img_block(lambda a: (a, 0, 0)),
                  pl.BlockSpec((C, 2 * C), lambda a: (0, 0)),
                  pl.BlockSpec((1, 2 * C), lambda a: (0, 0))],
        out_specs=(img_block(lambda a: (a, 0, 0)),
                   img_block(lambda a: (a, 0, 0)),
                   pl.BlockSpec((1, 1, C), lambda a: (a, 0, 0)),
                   pl.BlockSpec((1, 1, C), lambda a: (a, 0, 0))),
        compiler_params=cparams(("parallel",)),
    )(x, wqk, bqk)

    # ---- pass 2: streamed co-attention + per-image weighted-feature partial -
    # Keep the whole K tensor VMEM-resident when small enough (removes the
    # (B-1)x redundant re-streaming of K from HBM); otherwise stream per image.
    k_bytes = B * HW * C * 2
    k_resident = (2 * k_bytes) <= (8 * 1024 * 1024)
    if k_resident:
        k_spec = pl.BlockSpec((B, HW, C), lambda a, b: (0, 0, 0))
    else:
        k_spec = pl.BlockSpec((1, HW, C), lambda a, b: (b, 0, 0))

    proto_parts = pl.pallas_call(
        partial(_coatt_kernel, scale / B, k_resident),
        out_shape=jax.ShapeDtypeStruct((B, 1, C), f32),
        grid=(B, B),                                   # (query image, key image)
        in_specs=[img_block(lambda a, b: (a, 0, 0)),   # q_a  (resident per a)
                  k_spec,                              # k    (resident or streamed)
                  img_block(lambda a, b: (a, 0, 0))],  # x_a  (fetched once per a)
        out_specs=pl.BlockSpec((1, 1, C), lambda a, b: (a, 0, 0)),
        scratch_shapes=[pltpu.VMEM((HW, 1), f32)],
        compiler_params=cparams(("parallel", "arbitrary")),
    )(q, k, x)

    # ---- pass 3: prototype (tiny conv6) + AdaptiveMaxPool2d(1) --------------
    out = pl.pallas_call(
        partial(_finalize_kernel, 1.0 / (B * HW)),
        out_shape=jax.ShapeDtypeStruct((B, 1, C), f32),
        grid=(B,),
        in_specs=[pl.BlockSpec((B, 1, C), lambda a: (0, 0, 0)),
                  pl.BlockSpec((1, 1, C), lambda a: (a, 0, 0)),
                  pl.BlockSpec((1, 1, C), lambda a: (a, 0, 0)),
                  pl.BlockSpec((C, C), lambda a: (0, 0)),
                  pl.BlockSpec((1, C), lambda a: (0, 0))],
        out_specs=pl.BlockSpec((1, 1, C), lambda a: (a, 0, 0)),
        compiler_params=cparams(("parallel",)),
    )(proto_parts, xmax, xmin, w6t, b6r)

    return out.reshape(B, C, 1, 1)


def reference_forward(x_nchw, params):
    """Pure-JAX f32 mirror of the PyTorch forward (for correctness check)."""
    wq, bq, wk, bk, w6, b6 = params
    B, C, H, W = x_nchw.shape
    HW = H * W
    hp = jax.lax.Precision.HIGHEST
    xf = jnp.transpose(x_nchw, (0, 2, 3, 1)).reshape(B * HW, C)
    q = jnp.dot(xf, wq.T, precision=hp) + bq
    k = jnp.dot(xf, wk.T, precision=hp) + bk
    s = jnp.dot(q, k.T, precision=hp).reshape(B * HW, B, HW)
    w = jnp.max(s, axis=-1).mean(-1).reshape(B, HW) * (1.0 / (C ** 0.5))
    attn = jax.nn.softmax(w, axis=-1).reshape(B * HW, 1)
    y = jnp.dot(xf * attn, w6.T, precision=hp) + b6
    proto = jnp.mean(y, axis=0, keepdims=True)
    weighted = (xf * proto).reshape(B, HW, C)
    return jnp.max(weighted, axis=1).reshape(B, C, 1, 1)


if __name__ == "__main__":
    # Small, lane-friendly shapes consistent with the module
    # (in_channels -> 128, spatial 16x16 so HW = 256 is a multiple of 8).
    B, C, H, W = 2, 128, 16, 16
    key = jax.random.PRNGKey(0)
    kx, kwq, kbq, kwk, kbk, kw6, kb6 = jax.random.split(key, 7)

    bound = 1.0 / (C ** 0.5)   # PyTorch-style uniform init for 1x1 convs
    x = jax.random.normal(kx, (B, C, H, W), jnp.float32)
    params = (
        jax.random.uniform(kwq, (C, C), jnp.float32, -bound, bound),
        jax.random.uniform(kbq, (C,), jnp.float32, -bound, bound),
        jax.random.uniform(kwk, (C, C), jnp.float32, -bound, bound),
        jax.random.uniform(kbk, (C,), jnp.float32, -bound, bound),
        jax.random.uniform(kw6, (C, C), jnp.float32, -bound, bound),
        jax.random.uniform(kb6, (C,), jnp.float32, -bound, bound),
    )

    fwd = jax.jit(context_extractor2)
    out = jax.block_until_ready(fwd(x, params))

    ref = reference_forward(x, params)
    assert out.shape == (B, C, 1, 1), out.shape
    max_err = float(jnp.max(jnp.abs(out - ref)))
    # bf16 MXU operands with f32 accumulation; softmax/proto math stays f32.
    assert jnp.allclose(out, ref, rtol=1e-2, atol=1e-2), max_err

    print("KERNEL_OK")
</pallas_src>

<mosaic_0001>
module attributes {stable_mosaic.version = 11 : i64} {
  func.func @_project_kernel(%arg0: i32, %arg1: memref<1x256x128xf32, #tpu.memory_space<vmem>>, %arg2: memref<128x256xbf16, #tpu.memory_space<vmem>>, %arg3: memref<1x256xf32, #tpu.memory_space<vmem>>, %arg4: memref<1x256x128xbf16, #tpu.memory_space<vmem>>, %arg5: memref<1x256x128xbf16, #tpu.memory_space<vmem>>, %arg6: memref<1x1x128xf32, #tpu.memory_space<vmem>>, %arg7: memref<1x1x128xf32, #tpu.memory_space<vmem>>) attributes {dimension_semantics = [#tpu.dimension_semantics<parallel>], iteration_bounds = array<i64: 2>, scalar_prefetch = 0 : i64, scratch_operands = 0 : i64, tpu.core_type = #tpu.core_type<tc>, window_params = [{transform_indices = @transform_0, window_bounds = array<i64: 1, 256, 128>}, {pipeline_mode = #tpu.pipeline_mode<synchronous>, transform_indices = @transform_1, window_bounds = array<i64: 128, 256>}, {pipeline_mode = #tpu.pipeline_mode<synchronous>, transform_indices = @transform_2, window_bounds = array<i64: 1, 256>}, {transform_indices = @transform_3, window_bounds = array<i64: 1, 256, 128>}, {transform_indices = @transform_4, window_bounds = array<i64: 1, 256, 128>}, {transform_indices = @transform_5, window_bounds = array<i64: 1, 1, 128>}, {transform_indices = @transform_6, window_bounds = array<i64: 1, 1, 128>}]} {
    %c0 = arith.constant 0 : index
    %c0_0 = arith.constant 0 : index
    %c0_1 = arith.constant 0 : index
    %0 = vector.load %arg1[%c0, %c0_0, %c0_1] : memref<1x256x128xf32, #tpu.memory_space<vmem>>, vector<1x256x128xf32>
    %1 = vector.shape_cast %0 : vector<1x256x128xf32> to vector<256x128xf32>
    %2 = arith.truncf %1 : vector<256x128xf32> to vector<256x128xbf16>
    %c0_2 = arith.constant 0 : index
    %c0_3 = arith.constant 0 : index
    %3 = vector.load %arg2[%c0_2, %c0_3] : memref<128x256xbf16, #tpu.memory_space<vmem>>, vector<128x256xbf16>
    %cst = arith.constant dense<0.000000e+00> : vector<256x256xf32>
    %4 = tpu.matmul %2, %3, %cst {dimension_numbers = #tpu.dot_dimension_numbers<[1], [0], [0], [1], [0, 0, 1, 1], [], []>} : vector<256x128xbf16>, vector<128x256xbf16>, vector<256x256xf32> -> vector<256x256xf32>
    %c0_4 = arith.constant 0 : index
    %c0_5 = arith.constant 0 : index
    %5 = vector.load %arg3[%c0_4, %c0_5] : memref<1x256xf32, #tpu.memory_space<vmem>>, vector<1x256xf32>
    %6 = vector.broadcast %5 : vector<1x256xf32> to vector<256x256xf32>
    %7 = arith.addf %4, %6 : vector<256x256xf32>
    %8 = vector.extract_strided_slice %7 {offsets = [0, 0], sizes = [256, 128], strides = [1, 1]} : vector<256x256xf32> to vector<256x128xf32>
    %9 = arith.truncf %8 : vector<256x128xf32> to vector<256x128xbf16>
    %c0_6 = arith.constant 0 : index
    %c0_7 = arith.constant 0 : index
    %c0_8 = arith.constant 0 : index
    %10 = vector.load %arg4[%c0_6, %c0_7, %c0_8] : memref<1x256x128xbf16, #tpu.memory_space<vmem>>, vector<1x256x128xbf16>
    %11 = vector.shape_cast %10 : vector<1x256x128xbf16> to vector<256x128xbf16>
    %12 = vector.shape_cast %9 : vector<256x128xbf16> to vector<1x256x128xbf16>
    tpu.vector_store %arg4[%c0_6, %c0_7, %c0_8], %12 {strides = array<i32>} : memref<1x256x128xbf16, #tpu.memory_space<vmem>>, vector<1x256x128xbf16>,
    %13 = vector.extract_strided_slice %7 {offsets = [0, 128], sizes = [256, 128], strides = [1, 1]} : vector<256x256xf32> to vector<256x128xf32>
    %14 = arith.truncf %13 : vector<256x128xf32> to vector<256x128xbf16>
    %c0_9 = arith.constant 0 : index
    %c0_10 = arith.constant 0 : index
    %c0_11 = arith.constant 0 : index
    %15 = vector.load %arg5[%c0_9, %c0_10, %c0_11] : memref<1x256x128xbf16, #tpu.memory_space<vmem>>, vector<1x256x128xbf16>
    %16 = vector.shape_cast %15 : vector<1x256x128xbf16> to vector<256x128xbf16>
    %17 = vector.shape_cast %14 : vector<256x128xbf16> to vector<1x256x128xbf16>
    tpu.vector_store %arg5[%c0_9, %c0_10, %c0_11], %17 {strides = array<i32>} : memref<1x256x128xbf16, #tpu.memory_space<vmem>>, vector<1x256x128xbf16>,
    %cst_12 = arith.constant dense<0xFF800000> : vector<128xf32>
    %18 = vector.multi_reduction <maximumf>, %1, %cst_12 [0] : vector<256x128xf32> to vector<128xf32>
    %19 = vector.shape_cast %18 : vector<128xf32> to vector<1x128xf32>
    %c0_13 = arith.constant 0 : index
    %c0_14 = arith.constant 0 : index
    %c0_15 = arith.constant 0 : index
    %20 = vector.load %arg6[%c0_13, %c0_14, %c0_15] : memref<1x1x128xf32, #tpu.memory_space<vmem>>, vector<1x1x128xf32>
    %21 = vector.shape_cast %20 : vector<1x1x128xf32> to vector<1x128xf32>
    %22 = vector.shape_cast %19 : vector<1x128xf32> to vector<1x1x128xf32>
    tpu.vector_store %arg6[%c0_13, %c0_14, %c0_15], %22 {strides = array<i32>} : memref<1x1x128xf32, #tpu.memory_space<vmem>>, vector<1x1x128xf32>,
    %cst_16 = arith.constant dense<0x7F800000> : vector<128xf32>
    %23 = vector.multi_reduction <minimumf>, %1, %cst_16 [0] : vector<256x128xf32> to vector<128xf32>
    %24 = vector.shape_cast %23 : vector<128xf32> to vector<1x128xf32>
    %c0_17 = arith.constant 0 : index
    %c0_18 = arith.constant 0 : index
    %c0_19 = arith.constant 0 : index
    %25 = vector.load %arg7[%c0_17, %c0_18, %c0_19] : memref<1x1x128xf32, #tpu.memory_space<vmem>>, vector<1x1x128xf32>
    %26 = vector.shape_cast %25 : vector<1x1x128xf32> to vector<1x128xf32>
    %27 = vector.shape_cast %24 : vector<1x128xf32> to vector<1x1x128xf32>
    tpu.vector_store %arg7[%c0_17, %c0_18, %c0_19], %27 {strides = array<i32>} : memref<1x1x128xf32, #tpu.memory_space<vmem>>, vector<1x1x128xf32>,
    return
  }
  func.func @transform_0(%arg0: i32) -> (i32, i32, i32) {
    %c0_i32 = arith.constant 0 : i32
    %c0_i32_0 = arith.constant 0 : i32
    %c0_i32_1 = arith.constant 0 : i32
    return %arg0, %c0_i32, %c0_i32_0 : i32, i32, i32
  }
  func.func @transform_1(%arg0: i32) -> (i32, i32) {
    %c0_i32 = arith.constant 0 : i32
    %c0_i32_0 = arith.constant 0 : i32
    %c0_i32_1 = arith.constant 0 : i32
    return %c0_i32, %c0_i32_0 : i32, i32
  }
  func.func @transform_2(%arg0: i32) -> (i32, i32) {
    %c0_i32 = arith.constant 0 : i32
    %c0_i32_0 = arith.constant 0 : i32
    %c0_i32_1 = arith.constant 0 : i32
    return %c0_i32, %c0_i32_0 : i32, i32
  }
  func.func @transform_3(%arg0: i32) -> (i32, i32, i32) {
    %c0_i32 = arith.constant 0 : i32
    %c0_i32_0 = arith.constant 0 : i32
    %c0_i32_1 = arith.constant 0 : i32
    return %arg0, %c0_i32, %c0_i32_0 : i32, i32, i32
  }
  func.func @transform_4(%arg0: i32) -> (i32, i32, i32) {
    %c0_i32 = arith.constant 0 : i32
    %c0_i32_0 = arith.constant 0 : i32
    %c0_i32_1 = arith.constant 0 : i32
    return %arg0, %c0_i32, %c0_i32_0 : i32, i32, i32
  }
  func.func @transform_5(%arg0: i32) -> (i32, i32, i32) {
    %c0_i32 = arith.constant 0 : i32
    %c0_i32_0 = arith.constant 0 : i32
    %c0_i32_1 = arith.constant 0 : i32
    return %arg0, %c0_i32, %c0_i32_0 : i32, i32, i32
  }
  func.func @transform_6(%arg0: i32) -> (i32, i32, i32) {
    %c0_i32 = arith.constant 0 : i32
    %c0_i32_0 = arith.constant 0 : i32
    %c0_i32_1 = arith.constant 0 : i32
    return %arg0, %c0_i32, %c0_i32_0 : i32, i32, i32
  }
}

module attributes {stable_mosaic.version = 11 : i64} {
  func.func @_coatt_kernel(%arg0: i32, %arg1: i32, %arg2: memref<1x256x128xbf16, #tpu.memory_space<vmem>>, %arg3: memref<2x256x128xbf16, #tpu.memory_space<vmem>>, %arg4: memref<1x256x128xf32, #tpu.memory_space<vmem>>, %arg5: memref<1x1x128xf32, #tpu.memory_space<vmem>>, %arg6: memref<256x1xf32, #tpu.memory_space<vmem>>) attributes {dimension_semantics = [#tpu.dimension_semantics<parallel>, #tpu.dimension_semantics<arbitrary>], iteration_bounds = array<i64: 2, 2>, scalar_prefetch = 0 : i64, scratch_operands = 1 : i64, tpu.core_type = #tpu.core_type<tc>, window_params = [{transform_indices = @transform_0, window_bounds = array<i64: 1, 256, 128>}, {pipeline_mode = #tpu.pipeline_mode<synchronous>, transform_indices = @transform_1, window_bounds = array<i64: 2, 256, 128>}, {transform_indices = @transform_2, window_bounds = array<i64: 1, 256, 128>}, {transform_indices = @transform_3, window_bounds = array<i64: 1, 1, 128>}]} {
    %0 = arith.index_cast %arg1 : i32 to index
    %c0 = arith.constant 0 : index
    %c0_0 = arith.constant 0 : index
    %1 = vector.load %arg3[%0, %c0, %c0_0] : memref<2x256x128xbf16, #tpu.memory_space<vmem>>, vector<1x256x128xbf16>
    %2 = vector.shape_cast %1 : vector<1x256x128xbf16> to vector<256x128xbf16>
    %c0_1 = arith.constant 0 : index
    %c0_2 = arith.constant 0 : index
    %c0_3 = arith.constant 0 : index
    %3 = vector.load %arg2[%c0_1, %c0_2, %c0_3] : memref<1x256x128xbf16, #tpu.memory_space<vmem>>, vector<1x256x128xbf16>
    %4 = vector.shape_cast %3 : vector<1x256x128xbf16> to vector<256x128xbf16>
    %cst = arith.constant dense<0.000000e+00> : vector<256x256xf32>
    %5 = tpu.matmul %4, %2, %cst {dimension_numbers = #tpu.dot_dimension_numbers<[1], [1], [0], [0], [0, 0, 1, 0], [], []>} : vector<256x128xbf16>, vector<256x128xbf16>, vector<256x256xf32> -> vector<256x256xf32>
    %c0_i32 = arith.constant 0 : i32
    %6 = arith.cmpi eq, %arg1, %c0_i32 : i32
    %7 = arith.extui %6 : i1 to i32
    %c0_i32_4 = arith.constant 0 : i32
    %8 = arith.cmpi ne, %7, %c0_i32_4 : i32
    scf.if %8 {
      %cst_11 = arith.constant 0.000000e+00 : f32
      %17 = vector.broadcast %cst_11 : f32 to vector<256x1xf32>
      %c0_12 = arith.constant 0 : index
      %c0_13 = arith.constant 0 : index
      %18 = vector.load %arg6[%c0_12, %c0_13] : memref<256x1xf32, #tpu.memory_space<vmem>>, vector<256x1xf32>
      tpu.vector_store %arg6[%c0_12, %c0_13], %17 {strides = array<i32>} : memref<256x1xf32, #tpu.memory_space<vmem>>, vector<256x1xf32>,
    } else {
    }
    %c0_5 = arith.constant 0 : index
    %c0_6 = arith.constant 0 : index
    %9 = vector.load %arg6[%c0_5, %c0_6] : memref<256x1xf32, #tpu.memory_space<vmem>>, vector<256x1xf32>
    %cst_7 = arith.constant dense<0xFF800000> : vector<256xf32>
    %10 = vector.multi_reduction <maximumf>, %5, %cst_7 [1] : vector<256x256xf32> to vector<256xf32>
    %11 = vector.shape_cast %10 : vector<256xf32> to vector<256x1xf32>
    %12 = arith.addf %9, %11 : vector<256x1xf32>
    %c0_8 = arith.constant 0 : index
    %c0_9 = arith.constant 0 : index
    %13 = vector.load %arg6[%c0_8, %c0_9] : memref<256x1xf32, #tpu.memory_space<vmem>>, vector<256x1xf32>
    tpu.vector_store %arg6[%c0_8, %c0_9], %12 {strides = array<i32>} : memref<256x1xf32, #tpu.memory_space<vmem>>, vector<256x1xf32>,
    %c1_i32 = arith.constant 1 : i32
    %14 = arith.cmpi eq, %arg1, %c1_i32 : i32
    %15 = arith.extui %14 : i1 to i32
    %c0_i32_10 = arith.constant 0 : i32
    %16 = arith.cmpi ne, %15, %c0_i32_10 : i32
    scf.if %16 {
      %c0_11 = arith.constant 0 : index
      %c0_12 = arith.constant 0 : index
      %17 = vector.load %arg6[%c0_11, %c0_12] : memref<256x1xf32, #tpu.memory_space<vmem>>, vector<256x1xf32>
      %cst_13 = arith.constant 0.0441941731 : f32
      %18 = vector.broadcast %cst_13 : f32 to vector<256x1xf32>
      %19 = arith.mulf %17, %18 : vector<256x1xf32>
      %cst_14 = arith.constant dense<0xFF800000> : vector<1xf32>
      %20 = vector.multi_reduction <maximumf>, %19, %cst_14 [0] : vector<256x1xf32> to vector<1xf32>
      %21 = vector.shape_cast %20 : vector<1xf32> to vector<1x1xf32>
      %22 = vector.broadcast %21 : vector<1x1xf32> to vector<256x1xf32>
      %23 = arith.subf %19, %22 : vector<256x1xf32>
      %24 = math.exp %23 : vector<256x1xf32>
      %cst_15 = arith.constant dense<0.000000e+00> : vector<1xf32>
      %25 = vector.multi_reduction <add>, %24, %cst_15 [0] : vector<256x1xf32> to vector<1xf32>
      %26 = vector.shape_cast %25 : vector<1xf32> to vector<1x1xf32>
      %27 = tpu.reciprocal %26 {approx = true} : vector<1x1xf32> -> vector<1x1xf32>
      %28 = vector.broadcast %27 : vector<1x1xf32> to vector<256x1xf32>
      %29 = arith.mulf %24, %28 : vector<256x1xf32>
      %c0_16 = arith.constant 0 : index
      %c0_17 = arith.constant 0 : index
      %c0_18 = arith.constant 0 : index
      %30 = vector.load %arg4[%c0_16, %c0_17, %c0_18] : memref<1x256x128xf32, #tpu.memory_space<vmem>>, vector<1x256x128xf32>
      %31 = vector.shape_cast %30 : vector<1x256x128xf32> to vector<256x128xf32>
      %32 = vector.broadcast %29 : vector<256x1xf32> to vector<256x128xf32>
      %33 = arith.mulf %31, %32 : vector<256x128xf32>
      %cst_19 = arith.constant dense<0.000000e+00> : vector<128xf32>
      %34 = vector.multi_reduction <add>, %33, %cst_19 [0] : vector<256x128xf32> to vector<128xf32>
      %35 = vector.shape_cast %34 : vector<128xf32> to vector<1x128xf32>
      %c0_20 = arith.constant 0 : index
      %c0_21 = arith.constant 0 : index
      %c0_22 = arith.constant 0 : index
      %36 = vector.load %arg5[%c0_20, %c0_21, %c0_22] : memref<1x1x128xf32, #tpu.memory_space<vmem>>, vector<1x1x128xf32>
      %37 = vector.shape_cast %36 : vector<1x1x128xf32> to vector<1x128xf32>
      %38 = vector.shape_cast %35 : vector<1x128xf32> to vector<1x1x128xf32>
      tpu.vector_store %arg5[%c0_20, %c0_21, %c0_22], %38 {strides = array<i32>} : memref<1x1x128xf32, #tpu.memory_space<vmem>>, vector<1x1x128xf32>,
    } else {
    }
    return
  }
  func.func @transform_0(%arg0: i32, %arg1: i32) -> (i32, i32, i32) {
    %c0_i32 = arith.constant 0 : i32
    %c0_i32_0 = arith.constant 0 : i32
    %c0_i32_1 = arith.constant 0 : i32
    return %arg0, %c0_i32, %c0_i32_0 : i32, i32, i32
  }
  func.func @transform_1(%arg0: i32, %arg1: i32) -> (i32, i32, i32) {
    %c0_i32 = arith.constant 0 : i32
    %c0_i32_0 = arith.constant 0 : i32
    %c0_i32_1 = arith.constant 0 : i32
    %c0_i32_2 = arith.constant 0 : i32
    return %c0_i32, %c0_i32_0, %c0_i32_1 : i32, i32, i32
  }
  func.func @transform_2(%arg0: i32, %arg1: i32) -> (i32, i32, i32) {
    %c0_i32 = arith.constant 0 : i32
    %c0_i32_0 = arith.constant 0 : i32
    %c0_i32_1 = arith.constant 0 : i32
    return %arg0, %c0_i32, %c0_i32_0 : i32, i32, i32
  }
  func.func @transform_3(%arg0: i32, %arg1: i32) -> (i32, i32, i32) {
    %c0_i32 = arith.constant 0 : i32
    %c0_i32_0 = arith.constant 0 : i32
    %c0_i32_1 = arith.constant 0 : i32
    return %arg0, %c0_i32, %c0_i32_0 : i32, i32, i32
  }
}

module attributes {stable_mosaic.version = 11 : i64} {
  func.func @_finalize_kernel(%arg0: i32, %arg1: memref<2x1x128xf32, #tpu.memory_space<vmem>>, %arg2: memref<1x1x128xf32, #tpu.memory_space<vmem>>, %arg3: memref<1x1x128xf32, #tpu.memory_space<vmem>>, %arg4: memref<128x128xf32, #tpu.memory_space<vmem>>, %arg5: memref<1x128xf32, #tpu.memory_space<vmem>>, %arg6: memref<1x1x128xf32, #tpu.memory_space<vmem>>) attributes {dimension_semantics = [#tpu.dimension_semantics<parallel>], iteration_bounds = array<i64: 2>, scalar_prefetch = 0 : i64, scratch_operands = 0 : i64, tpu.core_type = #tpu.core_type<tc>, window_params = [{pipeline_mode = #tpu.pipeline_mode<synchronous>, transform_indices = @transform_0, window_bounds = array<i64: 2, 1, 128>}, {transform_indices = @transform_1, window_bounds = array<i64: 1, 1, 128>}, {transform_indices = @transform_2, window_bounds = array<i64: 1, 1, 128>}, {pipeline_mode = #tpu.pipeline_mode<synchronous>, transform_indices = @transform_3, window_bounds = array<i64: 128, 128>}, {pipeline_mode = #tpu.pipeline_mode<synchronous>, transform_indices = @transform_4, window_bounds = array<i64: 1, 128>}, {transform_indices = @transform_5, window_bounds = array<i64: 1, 1, 128>}]} {
    %c0 = arith.constant 0 : index
    %c0_0 = arith.constant 0 : index
    %c0_1 = arith.constant 0 : index
    %0 = vector.load %arg1[%c0, %c0_0, %c0_1] : memref<2x1x128xf32, #tpu.memory_space<vmem>>, vector<2x1x128xf32>
    %cst = arith.constant dense<0.000000e+00> : vector<1x128xf32>
    %1 = vector.multi_reduction <add>, %0, %cst [0] : vector<2x1x128xf32> to vector<1x128xf32>
    %cst_2 = arith.constant 0.001953125 : f32
    %2 = vector.broadcast %cst_2 : f32 to vector<1x128xf32>
    %3 = arith.mulf %1, %2 : vector<1x128xf32>
    %4 = vector.shape_cast %3 : vector<1x128xf32> to vector<1x128xf32>
    %5 = vector.broadcast %4 : vector<1x128xf32> to vector<8x128xf32>
    %c0_3 = arith.constant 0 : index
    %c0_4 = arith.constant 0 : index
    %6 = vector.load %arg4[%c0_3, %c0_4] : memref<128x128xf32, #tpu.memory_space<vmem>>, vector<128x128xf32>
    %cst_5 = arith.constant dense<0.000000e+00> : vector<8x128xf32>
    %7 = tpu.matmul %5, %6, %cst_5 {dimension_numbers = #tpu.dot_dimension_numbers<[1], [0], [0], [1], [0, 0, 1, 1], [], []>} : vector<8x128xf32>, vector<128x128xf32>, vector<8x128xf32> -> vector<8x128xf32>
    %8 = vector.extract_strided_slice %7 {offsets = [0, 0], sizes = [1, 128], strides = [1, 1]} : vector<8x128xf32> to vector<1x128xf32>
    %c0_6 = arith.constant 0 : index
    %c0_7 = arith.constant 0 : index
    %9 = vector.load %arg5[%c0_6, %c0_7] : memref<1x128xf32, #tpu.memory_space<vmem>>, vector<1x128xf32>
    %10 = arith.addf %8, %9 : vector<1x128xf32>
    %cst_8 = arith.constant 0.000000e+00 : f32
    %11 = vector.broadcast %cst_8 : f32 to vector<1x128xf32>
    %12 = arith.cmpf oge, %10, %11 : vector<1x128xf32>
    %c0_9 = arith.constant 0 : index
    %c0_10 = arith.constant 0 : index
    %c0_11 = arith.constant 0 : index
    %13 = vector.load %arg2[%c0_9, %c0_10, %c0_11] : memref<1x1x128xf32, #tpu.memory_space<vmem>>, vector<1x1x128xf32>
    %14 = vector.shape_cast %13 : vector<1x1x128xf32> to vector<1x128xf32>
    %15 = arith.mulf %10, %14 : vector<1x128xf32>
    %c0_12 = arith.constant 0 : index
    %c0_13 = arith.constant 0 : index
    %c0_14 = arith.constant 0 : index
    %16 = vector.load %arg3[%c0_12, %c0_13, %c0_14] : memref<1x1x128xf32, #tpu.memory_space<vmem>>, vector<1x1x128xf32>
    %17 = vector.shape_cast %16 : vector<1x1x128xf32> to vector<1x128xf32>
    %18 = arith.mulf %10, %17 : vector<1x128xf32>
    %19 = arith.select %12, %15, %18 : vector<1x128xi1>, vector<1x128xf32>
    %c0_15 = arith.constant 0 : index
    %c0_16 = arith.constant 0 : index
    %c0_17 = arith.constant 0 : index
    %20 = vector.load %arg6[%c0_15, %c0_16, %c0_17] : memref<1x1x128xf32, #tpu.memory_space<vmem>>, vector<1x1x128xf32>
    %21 = vector.shape_cast %20 : vector<1x1x128xf32> to vector<1x128xf32>
    %22 = vector.shape_cast %19 : vector<1x128xf32> to vector<1x1x128xf32>
    tpu.vector_store %arg6[%c0_15, %c0_16, %c0_17], %22 {strides = array<i32>} : memref<1x1x128xf32, #tpu.memory_space<vmem>>, vector<1x1x128xf32>,
    return
  }
  func.func @transform_0(%arg0: i32) -> (i32, i32, i32) {
    %c0_i32 = arith.constant 0 : i32
    %c0_i32_0 = arith.constant 0 : i32
    %c0_i32_1 = arith.constant 0 : i32
    %c0_i32_2 = arith.constant 0 : i32
    return %c0_i32, %c0_i32_0, %c0_i32_1 : i32, i32, i32
  }
  func.func @transform_1(%arg0: i32) -> (i32, i32, i32) {
    %c0_i32 = arith.constant 0 : i32
    %c0_i32_0 = arith.constant 0 : i32
    %c0_i32_1 = arith.constant 0 : i32
    return %arg0, %c0_i32, %c0_i32_0 : i32, i32, i32
  }
  func.func @transform_2(%arg0: i32) -> (i32, i32, i32) {
    %c0_i32 = arith.constant 0 : i32
    %c0_i32_0 = arith.constant 0 : i32
    %c0_i32_1 = arith.constant 0 : i32
    return %arg0, %c0_i32, %c0_i32_0 : i32, i32, i32
  }
  func.func @transform_3(%arg0: i32) -> (i32, i32) {
    %c0_i32 = arith.constant 0 : i32
    %c0_i32_0 = arith.constant 0 : i32
    %c0_i32_1 = arith.constant 0 : i32
    return %c0_i32, %c0_i32_0 : i32, i32
  }
  func.func @transform_4(%arg0: i32) -> (i32, i32) {
    %c0_i32 = arith.constant 0 : i32
    %c0_i32_0 = arith.constant 0 : i32
    %c0_i32_1 = arith.constant 0 : i32
    return %c0_i32, %c0_i32_0 : i32, i32
  }
  func.func @transform_5(%arg0: i32) -> (i32, i32, i32) {
    %c0_i32 = arith.constant 0 : i32
    %c0_i32_0 = arith.constant 0 : i32
    %c0_i32_1 = arith.constant 0 : i32
    return %arg0, %c0_i32, %c0_i32_0 : i32, i32, i32
  }
}

</mosaic_0001>

<llo_original>
// kernel: context_extractor2.5
$region0: #{context_extractor2.5}
  #allocation0 [shape = 'u32[]', space=smem, size = 0x4, offset = 0x4, fixed_abs, tag = 'smem constant byte address 0x4 - core index']
  #allocation1 [shape = 'u32[72,128]{1,0:T(1,128)}', space=vmem, size = 0x9000, scoped, tag = 'internal scratch']
  %s0 = inlined_call_operand.vmem [shape: f32[2,1,128], index: 0, kind: input, shape index: {}]
  %s1 = inlined_call_operand.vmem [shape: f32[2,1,128], index: 1, kind: input, shape index: {}]
  %s2 = inlined_call_operand.vmem [shape: f32[2,1,128], index: 2, kind: input, shape index: {}]
  %s3 = inlined_call_operand.vmem [shape: f32[128,128], index: 3, kind: input, shape index: {}]
  %s4 = inlined_call_operand.vmem [shape: f32[1,128], index: 4, kind: input, shape index: {}]
  %s5 = inlined_call_operand.hbm [shape: f32[2,1,128], index: 5, kind: output, shape index: {}]
  %s6 = sld [smem:[#allocation0]]
  $region53: #{context_extractor2.5} parent=0
    _
  %s8 = ssub.s32 1, %s6
  %s9 = scalar_select 0, %s8, %s6
  $region1: #{context_extractor2.5} parent=0
    #allocation2 [shape = 'u8[1024]{0}', space=vmem, size = 0x400, scoped, tag = 'output window, operand 0']
    #allocation3 [shape = 's32[2]{0}', space=sflag, size = 0x8, scoped, tag = 'scoped memory for context_extractor2.5']
    %10 = vsyncpa [#allocation3], 0
    %s11 = scalar_lea.sflag [#allocation3], 1
    %12 = vsyncpa %s11, 0
    loop: start=0, step=1, limit=4
    $region2: #{context_extractor2.5} parent=1 // loop_pre_header
      _
    $region3: #{context_extractor2.5} parent=1 // loop_header
      %s14 = sphi 0, %s18
      %p15 = scmp.ge.s32.totalorder %s14, 4
      %s22 = sphi 0, %s22
      %s24 = sphi 0, %s22
      %s25 = sphi 0, %s24
      %s39 = sphi 0, %s25
      %s45 = sphi 0, %s47
      %s48 = sphi 0, %s45
      %s49 = sphi 0, %s48
      %s65 = sphi 0, %s49
      %s71 = sphi 0, %s73
      %s74 = sphi 0, %s71
      %s75 = sphi 0, %s74
      %s91 = sphi 0, %s75
      %s95 = sphi 0, %s95
      %s97 = sphi 0, %s95
      %s98 = sphi 0, %s97
      %s112 = sphi 0, %s98
      %s116 = sphi 0, %s116
      %s118 = sphi 0, %s116
      %s119 = sphi 0, %s118
      %s133 = sphi 0, %s119
      %s139 = sphi 0, %s141
      %s142 = sphi 0, %s139
      %s143 = sphi 0, %s142
      %s159 = sphi 0, %s143
    $region4: #{context_extractor2.5} parent=1 // loop_header_branch
      %17 = sbr.rel (%p15) target = $region8
    $region5: #{context_extractor2.5} parent=1 // loop_body
      %s19 = ssub.s32 %s14, 1
      %s20 = ssub.s32 %s14, 2
      %s21 = sadd.s32 %s14, 1
      %s23 = sadd.s32 %s22, 1
      %p26 = scmp.eq.s32.totalorder %s14, 1
      %p27 = scmp.ne.s32.totalorder %s22, %s24
      %p28 = scmp.eq.s32.totalorder %s14, 0
      %p29 = por %p27, %p28
      %p30 = scmp.ne.s32.totalorder %s22, %s24
      %p31 = scmp.eq.s32.totalorder %s19, 1
      %p32 = por %p30, %p31
      %p33 = scmp.ne.s32.totalorder %s24, %s25
      %p34 = scmp.eq.s32.totalorder %s19, 0
      %p35 = por %p33, %p34
      %p36 = scmp.ne.s32.totalorder %s24, %s25
      %p37 = scmp.eq.s32.totalorder %s20, 1
      %p38 = por %p36, %p37
      %p40 = scmp.ne.s32.totalorder %s25, %s39
      %p41 = scmp.eq.s32.totalorder %s20, 0
      %p42 = por %p40, %p41
      %s43 = ssub.s32 %s14, %s21
      %p44 = scmp.eq.s32.totalorder %s43, 0
      %s46 = sadd.s32 %s45, 1
      %s47 = scalar_select %p44, %s45, %s46
      %p50 = pneg %p44
      %p51 = scmp.eq.s32.totalorder %s14, 1
      %p52 = por %p50, %p51
      %p53 = scmp.ne.s32.totalorder %s45, %s48
      %p54 = scmp.eq.s32.totalorder %s14, 0
      %p55 = por %p53, %p54
      %p56 = scmp.ne.s32.totalorder %s45, %s48
      %p57 = scmp.eq.s32.totalorder %s19, 1
      %p58 = por %p56, %p57
      %p59 = scmp.ne.s32.totalorder %s48, %s49
      %p60 = scmp.eq.s32.totalorder %s19, 0
      %p61 = por %p59, %p60
      %p62 = scmp.ne.s32.totalorder %s48, %s49
      %p63 = scmp.eq.s32.totalorder %s20, 1
      %p64 = por %p62, %p63
      %p66 = scmp.ne.s32.totalorder %s49, %s65
      %p67 = scmp.eq.s32.totalorder %s20, 0
      %p68 = por %p66, %p67
      %s69 = ssub.s32 %s14, %s21
      %p70 = scmp.eq.s32.totalorder %s69, 0
      %s72 = sadd.s32 %s71, 1
      %s73 = scalar_select %p70, %s71, %s72
      %p76 = pneg %p70
      %p77 = scmp.eq.s32.totalorder %s14, 1
      %p78 = por %p76, %p77
      %p79 = scmp.ne.s32.totalorder %s71, %s74
      %p80 = scmp.eq.s32.totalorder %s14, 0
      %p81 = por %p79, %p80
      %p82 = scmp.ne.s32.totalorder %s71, %s74
      %p83 = scmp.eq.s32.totalorder %s19, 1
      %p84 = por %p82, %p83
      %p85 = scmp.ne.s32.totalorder %s74, %s75
      %p86 = scmp.eq.s32.totalorder %s19, 0
      %p87 = por %p85, %p86
      %p88 = scmp.ne.s32.totalorder %s74, %s75
      %p89 = scmp.eq.s32.totalorder %s20, 1
      %p90 = por %p88, %p89
      %p92 = scmp.ne.s32.totalorder %s75, %s91
      %p93 = scmp.eq.s32.totalorder %s20, 0
      %p94 = por %p92, %p93
      %s96 = sadd.s32 %s95, 1
      %p99 = scmp.eq.s32.totalorder %s14, 1
      %p100 = scmp.ne.s32.totalorder %s95, %s97
      %p101 = scmp.eq.s32.totalorder %s14, 0
      %p102 = por %p100, %p101
      %p103 = scmp.ne.s32.totalorder %s95, %s97
      %p104 = scmp.eq.s32.totalorder %s19, 1
      %p105 = por %p103, %p104
      %p106 = scmp.ne.s32.totalorder %s97, %s98
      %p107 = scmp.eq.s32.totalorder %s19, 0
      %p108 = por %p106, %p107
      %p109 = scmp.ne.s32.totalorder %s97, %s98
      %p110 = scmp.eq.s32.totalorder %s20, 1
      %p111 = por %p109, %p110
      %p113 = scmp.ne.s32.totalorder %s98, %s112
      %p114 = scmp.eq.s32.totalorder %s20, 0
      %p115 = por %p113, %p114
      %s117 = sadd.s32 %s116, 1
      %p120 = scmp.eq.s32.totalorder %s14, 1
      %p121 = scmp.ne.s32.totalorder %s116, %s118
      %p122 = scmp.eq.s32.totalorder %s14, 0
      %p123 = por %p121, %p122
      %p124 = scmp.ne.s32.totalorder %s116, %s118
      %p125 = scmp.eq.s32.totalorder %s19, 1
      %p126 = por %p124, %p125
      %p127 = scmp.ne.s32.totalorder %s118, %s119
      %p128 = scmp.eq.s32.totalorder %s19, 0
      %p129 = por %p127, %p128
      %p130 = scmp.ne.s32.totalorder %s118, %s119
      %p131 = scmp.eq.s32.totalorder %s20, 1
      %p132 = por %p130, %p131
      %p134 = scmp.ne.s32.totalorder %s119, %s133
      %p135 = scmp.eq.s32.totalorder %s20, 0
      %p136 = por %p134, %p135
      %s137 = ssub.s32 %s14, %s21
      %p138 = scmp.eq.s32.totalorder %s137, 0
      %s140 = sadd.s32 %s139, 1
      %s141 = scalar_select %p138, %s139, %s140
      %p144 = pneg %p138
      %p145 = scmp.eq.s32.totalorder %s14, 1
      %p146 = por %p144, %p145
      %p147 = scmp.ne.s32.totalorder %s139, %s142
      %p148 = scmp.eq.s32.totalorder %s14, 0
      %p149 = por %p147, %p148
      %p150 = scmp.ne.s32.totalorder %s139, %s142
      %p151 = scmp.eq.s32.totalorder %s19, 1
      %p152 = por %p150, %p151
      %p153 = scmp.ne.s32.totalorder %s142, %s143
      %p154 = scmp.eq.s32.totalorder %s19, 0
      %p155 = por %p153, %p154
      %p156 = scmp.ne.s32.totalorder %s142, %s143
      %p157 = scmp.eq.s32.totalorder %s20, 1
      %p158 = por %p156, %p157
      %p160 = scmp.ne.s32.totalorder %s143, %s159
      %p161 = scmp.eq.s32.totalorder %s20, 0
      %p162 = por %p160, %p161
      %p163 = scmp.le.s32.totalorder 1, %s14
      %p164 = scmp.lt.s32.totalorder %s14, 3
      %p165 = pnand %p163, %p164
      %p166 = pneg %p165
      // Predicated region
      $region9: #{context_extractor2.5} parent=5 // pred_check
        _
      $region10: #{context_extractor2.5} parent=5 // pred_check_branch
        %168 = sbr.rel (%p165) target = $region12
      $region11: #{context_extractor2.5} parent=5 // pred_region
        %s169 = ssub.s32 %s14, 1
        // Predicated region
        $region13: #{context_extractor2.5} parent=11 // pred_check
          %p170 = pneg %p35
        $region14: #{context_extractor2.5} parent=11 // pred_check_branch
          %172 = sbr.rel (%p170) target = $region16
        $region15: #{context_extractor2.5} parent=11 // pred_region
          _
        $region16: #{context_extractor2.5} parent=11 // pred_fallthru
          _
        // Predicated region
        $region17: #{context_extractor2.5} parent=11 // pred_check
          %p173 = pneg %p108
        $region18: #{context_extractor2.5} parent=11 // pred_check_branch
          %175 = sbr.rel (%p173) target = $region20
        $region19: #{context_extractor2.5} parent=11 // pred_region
          _
        $region20: #{context_extractor2.5} parent=11 // pred_fallthru
          _
        // Predicated region
        $region21: #{context_extractor2.5} parent=11 // pred_check
          %p176 = pneg %p129
        $region22: #{context_extractor2.5} parent=11 // pred_check_branch
          %178 = sbr.rel (%p176) target = $region24
        $region23: #{context_extractor2.5} parent=11 // pred_region
          _
        $region24: #{context_extractor2.5} parent=11 // pred_fallthru
          _
      $region12: #{context_extractor2.5} parent=5 // pred_fallthru
        _
      %p179 = scmp.lt.s32.totalorder %s14, 2
      // Predicated region
      $region25: #{context_extractor2.5} parent=5 // pred_check
        %p180 = pneg %p179
      $region26: #{context_extractor2.5} parent=5 // pred_check_branch
        %182 = sbr.rel (%p180) target = $region28
      $region27: #{context_extractor2.5} parent=5 // pred_region
        // Predicated region
        $region29: #{context_extractor2.5} parent=27 // pred_check
          %p183 = pneg %p55
        $region30: #{context_extractor2.5} parent=27 // pred_check_branch
          %185 = sbr.rel (%p183) target = $region32
        $region31: #{context_extractor2.5} parent=27 // pred_region
          %p186 = scmp.lt.s32.totalorder %s14, 1
          %s187 = scalar_select %p186, %s14, 1
          %s188 = scalar_lea.vmem %s1, %s187
        $region32: #{context_extractor2.5} parent=27 // pred_fallthru
          _
        // Predicated region
        $region33: #{context_extractor2.5} parent=27 // pred_check
          %p189 = pneg %p81
        $region34: #{context_extractor2.5} parent=27 // pred_check_branch
          %191 = sbr.rel (%p189) target = $region36
        $region35: #{context_extractor2.5} parent=27 // pred_region
          %p192 = scmp.lt.s32.totalorder %s14, 1
          %s193 = scalar_select %p192, %s14, 1
          %s194 = scalar_lea.vmem %s2, %s193
        $region36: #{context_extractor2.5} parent=27 // pred_fallthru
          _
      $region28: #{context_extractor2.5} parent=5 // pred_fallthru
        _
      %p195 = scmp.le.s32.totalorder 1, %s14
      %p196 = scmp.lt.s32.totalorder %s14, 3
      %p197 = pnand %p195, %p196
      %p198 = pneg %p197
      // Predicated region
      $region37: #{context_extractor2.5} parent=5 // pred_check
        _
      $region38: #{context_extractor2.5} parent=5 // pred_check_branch
        %200 = sbr.rel (%p197) target = $region40
      $region39: #{context_extractor2.5} parent=5 // pred_region
        %s201 = ssub.s32 %s14, 1
        %p202 = pneg %p35
        %p203 = pneg %p32
        %p204 = scmp.lt.s32.totalorder %s19, 1
        %s205 = scalar_select %p204, %s19, 1
        %s206 = scalar_lea.vmem %s1, %s205
        %p207 = pneg %p61
        %p208 = pneg %p58
        %p209 = scmp.lt.s32.totalorder %s19, 1
        %s210 = scalar_select %p209, %s19, 1
        %s211 = scalar_lea.vmem %s2, %s210
        %p212 = pneg %p87
        %p213 = pneg %p84
        %p214 = pneg %p108
        %p215 = pneg %p105
        %p216 = pneg %p129
        %p217 = pneg %p126
        %p218 = pneg %p155
        %p219 = pneg %p152
        %s220 = sand.u32 %s142, 1
        %s221 = scalar_lea.sflag [#allocation3], %s220
        %s222 = sand.u32 %s142, 1
        %s223 = scalar_lea.vmem [#allocation2], %s222
        %p224 = scmp.lt.s32.totalorder %s19, 1
        %s225 = scalar_select %p224, %s19, 1
        %s226 = scalar_lea.vmem %s1, %s225
        %p227 = scmp.lt.s32.totalorder %s19, 1
        %s228 = scalar_select %p227, %s19, 1
        %s229 = scalar_lea.vmem %s2, %s228
        %v230 = vld [vmem:[%s0] sm:$0x1]
        %v231 = vld [vmem:[%s0 + $0x1] sm:$0x1]
        %vm232 = vcmask 1040384
        %v233 = vsel %vm232, %v230, 0.0
        %v234 = vsel %vm232, %v231, 0.0
        %v235 = vadd.f32 %v233, %v234
        %v236 = vmul.f32 %v235, 0.001953125
        %v237 = vperm.slane %v236, 0
        %v238 = vld [vmem:[%s3] sm:$0xff]
        %v239 = vld [vmem:[%s3 + $0x8] sm:$0xff]
        %v240 = vld [vmem:[%s3 + $0x10] sm:$0xff]
        %v241 = vld [vmem:[%s3 + $0x18] sm:$0xff]
        %v242 = vld [vmem:[%s3 + $0x20] sm:$0xff]
        %v243 = vld [vmem:[%s3 + $0x28] sm:$0xff]
        %v244 = vld [vmem:[%s3 + $0x30] sm:$0xff]
        %v245 = vld [vmem:[%s3 + $0x38] sm:$0xff]
        %v246 = vld [vmem:[%s3 + $0x40] sm:$0xff]
        %v247 = vld [vmem:[%s3 + $0x48] sm:$0xff]
        %v248 = vld [vmem:[%s3 + $0x50] sm:$0xff]
        %v249 = vld [vmem:[%s3 + $0x58] sm:$0xff]
        %v250 = vld [vmem:[%s3 + $0x60] sm:$0xff]
        %v251 = vld [vmem:[%s3 + $0x68] sm:$0xff]
        %v252 = vld [vmem:[%s3 + $0x70] sm:$0xff]
        %v253 = vld [vmem:[%s3 + $0x78] sm:$0xff]
        %254 = vmatpush.msra.mxu0 %v253
        %255 = vmatpush.msra.mxu0 %v252
        %256 = vmatpush.msra.mxu0 %v251
        %257 = vmatpush.msra.mxu0 %v250
        %258 = vmatpush.msra.mxu0 %v249
        %259 = vmatpush.msra.mxu0 %v248
        %260 = vmatpush.msra.mxu0 %v247
        %261 = vmatpush.msra.mxu0 %v246
        %262 = vmatpush.msra.mxu0 %v245
        %263 = vmatpush.msra.mxu0 %v244
        %264 = vmatpush.msra.mxu0 %v243
        %265 = vmatpush.msra.mxu0 %v242
        %266 = vmatpush.msra.mxu0 %v241
        %267 = vmatpush.msra.mxu0 %v240
        %268 = vmatpush.msra.mxu0 %v239
        %269 = vmatpush.msra.mxu0 %v238
        %270 = vmatmul.f32.gmra.mxu0 %v237
        %v271 = vpop.f32.mrf.mxu0
        %v272 = vadd.f32 0.0, %v271
        %273 = vdwg.mxu0
        %v274 = vld [vmem:[%s4] sm:$0x1]
        %v275 = vadd.f32 %v272, %v274
        %vm276 = vcmp.ge.f32.partialorder %v275, 0.0
        %v277 = vld [vmem:[%s226] sm:$0x1]
        %v278 = vmul.f32 %v275, %v277
        %v279 = vld [vmem:[%s229] sm:$0x1]
        %v280 = vmul.f32 %v275, %v279
        %v281 = vsel %vm276, %v278, %v280
        %282 = vst [vmem:[%s223] sm:$0x1] %v281
        %s283 = sand.u32 %s142, 1
        %s284 = scalar_lea.sflag [#allocation3], %s283
        %s285 = sand.u32 %s142, 1
        %s286 = scalar_lea.vmem [#allocation2], %s285
        // Predicated region
        $region41: #{context_extractor2.5} parent=39 // pred_check
          %p287 = pneg %p152
        $region42: #{context_extractor2.5} parent=39 // pred_check_branch
          %289 = sbr.rel (%p287) target = $region44
        $region43: #{context_extractor2.5} parent=39 // pred_region
          %291 = vsyncadd %s284, 0
          %s292 = scalar_lea.hbm %s5, %s19
          %s294 = sshll.u32 %s286, 4
          %s295 = int_to_ptr.vmem [resolvable:$true] %s294
          %s296 = sshll.u32 %s292, 4
          %s297 = int_to_ptr.hbm [resolvable:$true] %s296
          %299 = dma.vmem_to_hbm [thread:$0]  %s295, 16, %s297, %s284
        $region44: #{context_extractor2.5} parent=39 // pred_fallthru
          _
      $region40: #{context_extractor2.5} parent=5 // pred_fallthru
        _
      %p300 = scmp.le.s32.totalorder 2, %s14
      // Predicated region
      $region45: #{context_extractor2.5} parent=5 // pred_check
        %p301 = pneg %p300
      $region46: #{context_extractor2.5} parent=5 // pred_check_branch
        %303 = sbr.rel (%p301) target = $region48
      $region47: #{context_extractor2.5} parent=5 // pred_region
        %s304 = ssub.s32 %s14, 2
        // Predicated region
        $region49: #{context_extractor2.5} parent=47 // pred_check
          %p305 = pneg %p158
        $region50: #{context_extractor2.5} parent=47 // pred_check_branch
          %307 = sbr.rel (%p305) target = $region52
        $region51: #{context_extractor2.5} parent=47 // pred_region
          %s308 = sand.u32 %s143, 1
          %s309 = scalar_lea.sflag [#allocation3], %s308
          %s310 = sand.u32 %s143, 1
          %s311 = scalar_lea.vmem [#allocation2], %s310
          %313 = dma.done %s309, 16
        $region52: #{context_extractor2.5} parent=47 // pred_fallthru
          _
      $region48: #{context_extractor2.5} parent=5 // pred_fallthru
        _
    $region6: #{context_extractor2.5} parent=1 // loop_footer
      %s18 = sadd.s32 1, %s14
    $region7: #{context_extractor2.5} parent=1 // loop_footer_branch
      %13 = sbr.rel target = $region3
    $region8: #{context_extractor2.5} parent=1 // loop_exit
      _
    %314 = vsyncpa [#allocation3], 1
    %s315 = scalar_lea.sflag [#allocation3], 1
    %316 = vsyncpa %s315, 1

// kernel: context_extractor2.3
$region0: #{context_extractor2.3}
  #allocation0 [shape = 'u32[]', space=smem, size = 0x4, offset = 0x4, fixed_abs, tag = 'smem constant byte address 0x4 - core index']
  #allocation1 [shape = 'u32[72,128]{1,0:T(1,128)}', space=vmem, size = 0x9000, scoped, tag = 'internal scratch']
  %s0 = inlined_call_operand.hbm [shape: f32[2,256,128], index: 0, kind: input, shape index: {}]
  %s1 = inlined_call_operand.vmem [shape: bf16[128,256], index: 1, kind: input, shape index: {}]
  %s2 = inlined_call_operand.vmem [shape: f32[1,256], index: 2, kind: input, shape index: {}]
  %s3 = inlined_call_operand.vmem [shape: bf16[2,256,128], index: 3, kind: output, shape index: {0}]
  %s4 = inlined_call_operand.vmem [shape: bf16[2,256,128], index: 4, kind: output, shape index: {1}]
  %s5 = inlined_call_operand.vmem [shape: f32[2,1,128], index: 5, kind: output, shape index: {2}]
  %s6 = inlined_call_operand.vmem [shape: f32[2,1,128], index: 6, kind: output, shape index: {3}]
  %7 = xla_tuple %s3, %s4, %s5, %s6
  %s8 = sld [smem:[#allocation0]]
  $region73: #{context_extractor2.3} parent=0
    _
  %s10 = ssub.s32 1, %s8
  %s11 = scalar_select 0, %s10, %s8
  $region1: #{context_extractor2.3} parent=0
    #allocation2 [shape = 'u8[262144]{0}', space=vmem, size = 0x40000, scoped, tag = 'input window, operand 0']
    #allocation3 [shape = 's32[2]{0}', space=sflag, size = 0x8, scoped, tag = 'scoped memory for context_extractor2.3']
    %12 = vsyncpa [#allocation3], 0
    %s13 = scalar_lea.sflag [#allocation3], 1
    %14 = vsyncpa %s13, 0
    loop: start=0, step=1, limit=4
    $region2: #{context_extractor2.3} parent=1 // loop_pre_header
      _
    $region3: #{context_extractor2.3} parent=1 // loop_header
      %s16 = sphi 0, %s20
      %p17 = scmp.ge.s32.totalorder %s16, 4
      %s26 = sphi 0, %s28
      %s29 = sphi 0, %s26
      %s30 = sphi 0, %s29
      %s46 = sphi 0, %s30
      %s50 = sphi 0, %s50
      %s52 = sphi 0, %s50
      %s53 = sphi 0, %s52
      %s67 = sphi 0, %s53
      %s71 = sphi 0, %s71
      %s73 = sphi 0, %s71
      %s74 = sphi 0, %s73
      %s88 = sphi 0, %s74
      %s94 = sphi 0, %s96
      %s97 = sphi 0, %s94
      %s98 = sphi 0, %s97
      %s114 = sphi 0, %s98
      %s120 = sphi 0, %s122
      %s123 = sphi 0, %s120
      %s124 = sphi 0, %s123
      %s140 = sphi 0, %s124
      %s146 = sphi 0, %s148
      %s149 = sphi 0, %s146
      %s150 = sphi 0, %s149
      %s166 = sphi 0, %s150
      %s172 = sphi 0, %s174
      %s175 = sphi 0, %s172
      %s176 = sphi 0, %s175
      %s192 = sphi 0, %s176
    $region4: #{context_extractor2.3} parent=1 // loop_header_branch
      %19 = sbr.rel (%p17) target = $region8
    $region5: #{context_extractor2.3} parent=1 // loop_body
      %s21 = ssub.s32 %s16, 1
      %s22 = ssub.s32 %s16, 2
      %s23 = sadd.s32 %s16, 1
      %s24 = ssub.s32 %s16, %s23
      %p25 = scmp.eq.s32.totalorder %s24, 0
      %s27 = sadd.s32 %s26, 1
      %s28 = scalar_select %p25, %s26, %s27
      %p31 = pneg %p25
      %p32 = scmp.eq.s32.totalorder %s16, 1
      %p33 = por %p31, %p32
      %p34 = scmp.ne.s32.totalorder %s26, %s29
      %p35 = scmp.eq.s32.totalorder %s16, 0
      %p36 = por %p34, %p35
      %p37 = scmp.ne.s32.totalorder %s26, %s29
      %p38 = scmp.eq.s32.totalorder %s21, 1
      %p39 = por %p37, %p38
      %p40 = scmp.ne.s32.totalorder %s29, %s30
      %p41 = scmp.eq.s32.totalorder %s21, 0
      %p42 = por %p40, %p41
      %p43 = scmp.ne.s32.totalorder %s29, %s30
      %p44 = scmp.eq.s32.totalorder %s22, 1
      %p45 = por %p43, %p44
      %p47 = scmp.ne.s32.totalorder %s30, %s46
      %p48 = scmp.eq.s32.totalorder %s22, 0
      %p49 = por %p47, %p48
      %s51 = sadd.s32 %s50, 1
      %p54 = scmp.eq.s32.totalorder %s16, 1
      %p55 = scmp.ne.s32.totalorder %s50, %s52
      %p56 = scmp.eq.s32.totalorder %s16, 0
      %p57 = por %p55, %p56
      %p58 = scmp.ne.s32.totalorder %s50, %s52
      %p59 = scmp.eq.s32.totalorder %s21, 1
      %p60 = por %p58, %p59
      %p61 = scmp.ne.s32.totalorder %s52, %s53
      %p62 = scmp.eq.s32.totalorder %s21, 0
      %p63 = por %p61, %p62
      %p64 = scmp.ne.s32.totalorder %s52, %s53
      %p65 = scmp.eq.s32.totalorder %s22, 1
      %p66 = por %p64, %p65
      %p68 = scmp.ne.s32.totalorder %s53, %s67
      %p69 = scmp.eq.s32.totalorder %s22, 0
      %p70 = por %p68, %p69
      %s72 = sadd.s32 %s71, 1
      %p75 = scmp.eq.s32.totalorder %s16, 1
      %p76 = scmp.ne.s32.totalorder %s71, %s73
      %p77 = scmp.eq.s32.totalorder %s16, 0
      %p78 = por %p76, %p77
      %p79 = scmp.ne.s32.totalorder %s71, %s73
      %p80 = scmp.eq.s32.totalorder %s21, 1
      %p81 = por %p79, %p80
      %p82 = scmp.ne.s32.totalorder %s73, %s74
      %p83 = scmp.eq.s32.totalorder %s21, 0
      %p84 = por %p82, %p83
      %p85 = scmp.ne.s32.totalorder %s73, %s74
      %p86 = scmp.eq.s32.totalorder %s22, 1
      %p87 = por %p85, %p86
      %p89 = scmp.ne.s32.totalorder %s74, %s88
      %p90 = scmp.eq.s32.totalorder %s22, 0
      %p91 = por %p89, %p90
      %s92 = ssub.s32 %s16, %s23
      %p93 = scmp.eq.s32.totalorder %s92, 0
      %s95 = sadd.s32 %s94, 1
      %s96 = scalar_select %p93, %s94, %s95
      %p99 = pneg %p93
      %p100 = scmp.eq.s32.totalorder %s16, 1
      %p101 = por %p99, %p100
      %p102 = scmp.ne.s32.totalorder %s94, %s97
      %p103 = scmp.eq.s32.totalorder %s16, 0
      %p104 = por %p102, %p103
      %p105 = scmp.ne.s32.totalorder %s94, %s97
      %p106 = scmp.eq.s32.totalorder %s21, 1
      %p107 = por %p105, %p106
      %p108 = scmp.ne.s32.totalorder %s97, %s98
      %p109 = scmp.eq.s32.totalorder %s21, 0
      %p110 = por %p108, %p109
      %p111 = scmp.ne.s32.totalorder %s97, %s98
      %p112 = scmp.eq.s32.totalorder %s22, 1
      %p113 = por %p111, %p112
      %p115 = scmp.ne.s32.totalorder %s98, %s114
      %p116 = scmp.eq.s32.totalorder %s22, 0
      %p117 = por %p115, %p116
      %s118 = ssub.s32 %s16, %s23
      %p119 = scmp.eq.s32.totalorder %s118, 0
      %s121 = sadd.s32 %s120, 1
      %s122 = scalar_select %p119, %s120, %s121
      %p125 = pneg %p119
      %p126 = scmp.eq.s32.totalorder %s16, 1
      %p127 = por %p125, %p126
      %p128 = scmp.ne.s32.totalorder %s120, %s123
      %p129 = scmp.eq.s32.totalorder %s16, 0
      %p130 = por %p128, %p129
      %p131 = scmp.ne.s32.totalorder %s120, %s123
      %p132 = scmp.eq.s32.totalorder %s21, 1
      %p133 = por %p131, %p132
      %p134 = scmp.ne.s32.totalorder %s123, %s124
      %p135 = scmp.eq.s32.totalorder %s21, 0
      %p136 = por %p134, %p135
      %p137 = scmp.ne.s32.totalorder %s123, %s124
      %p138 = scmp.eq.s32.totalorder %s22, 1
      %p139 = por %p137, %p138
      %p141 = scmp.ne.s32.totalorder %s124, %s140
      %p142 = scmp.eq.s32.totalorder %s22, 0
      %p143 = por %p141, %p142
      %s144 = ssub.s32 %s16, %s23
      %p145 = scmp.eq.s32.totalorder %s144, 0
      %s147 = sadd.s32 %s146, 1
      %s148 = scalar_select %p145, %s146, %s147
      %p151 = pneg %p145
      %p152 = scmp.eq.s32.totalorder %s16, 1
      %p153 = por %p151, %p152
      %p154 = scmp.ne.s32.totalorder %s146, %s149
      %p155 = scmp.eq.s32.totalorder %s16, 0
      %p156 = por %p154, %p155
      %p157 = scmp.ne.s32.totalorder %s146, %s149
      %p158 = scmp.eq.s32.totalorder %s21, 1
      %p159 = por %p157, %p158
      %p160 = scmp.ne.s32.totalorder %s149, %s150
      %p161 = scmp.eq.s32.totalorder %s21, 0
      %p162 = por %p160, %p161
      %p163 = scmp.ne.s32.totalorder %s149, %s150
      %p164 = scmp.eq.s32.totalorder %s22, 1
      %p165 = por %p163, %p164
      %p167 = scmp.ne.s32.totalorder %s150, %s166
      %p168 = scmp.eq.s32.totalorder %s22, 0
      %p169 = por %p167, %p168
      %s170 = ssub.s32 %s16, %s23
      %p171 = scmp.eq.s32.totalorder %s170, 0
      %s173 = sadd.s32 %s172, 1
      %s174 = scalar_select %p171, %s172, %s173
      %p177 = pneg %p171
      %p178 = scmp.eq.s32.totalorder %s16, 1
      %p179 = por %p177, %p178
      %p180 = scmp.ne.s32.totalorder %s172, %s175
      %p181 = scmp.eq.s32.totalorder %s16, 0
      %p182 = por %p180, %p181
      %p183 = scmp.ne.s32.totalorder %s172, %s175
      %p184 = scmp.eq.s32.totalorder %s21, 1
      %p185 = por %p183, %p184
      %p186 = scmp.ne.s32.totalorder %s175, %s176
      %p187 = scmp.eq.s32.totalorder %s21, 0
      %p188 = por %p186, %p187
      %p189 = scmp.ne.s32.totalorder %s175, %s176
      %p190 = scmp.eq.s32.totalorder %s22, 1
      %p191 = por %p189, %p190
      %p193 = scmp.ne.s32.totalorder %s176, %s192
      %p194 = scmp.eq.s32.totalorder %s22, 0
      %p195 = por %p193, %p194
      %p196 = scmp.le.s32.totalorder 1, %s16
      %p197 = scmp.lt.s32.totalorder %s16, 3
      %p198 = pnand %p196, %p197
      %p199 = pneg %p198
      // Predicated region
      $region9: #{context_extractor2.3} parent=5 // pred_check
        _
      $region10: #{context_extractor2.3} parent=5 // pred_check_branch
        %201 = sbr.rel (%p198) target = $region12
      $region11: #{context_extractor2.3} parent=5 // pred_region
        %s202 = ssub.s32 %s16, 1
        // Predicated region
        $region13: #{context_extractor2.3} parent=11 // pred_check
          %p203 = pneg %p63
        $region14: #{context_extractor2.3} parent=11 // pred_check_branch
          %205 = sbr.rel (%p203) target = $region16
        $region15: #{context_extractor2.3} parent=11 // pred_region
          _
        $region16: #{context_extractor2.3} parent=11 // pred_fallthru
          _
        // Predicated region
        $region17: #{context_extractor2.3} parent=11 // pred_check
          %p206 = pneg %p84
        $region18: #{context_extractor2.3} parent=11 // pred_check_branch
          %208 = sbr.rel (%p206) target = $region20
        $region19: #{context_extractor2.3} parent=11 // pred_region
          _
        $region20: #{context_extractor2.3} parent=11 // pred_fallthru
          _
      $region12: #{context_extractor2.3} parent=5 // pred_fallthru
        _
      %p209 = scmp.lt.s32.totalorder %s16, 2
      // Predicated region
      $region21: #{context_extractor2.3} parent=5 // pred_check
        %p210 = pneg %p209
      $region22: #{context_extractor2.3} parent=5 // pred_check_branch
        %212 = sbr.rel (%p210) target = $region24
      $region23: #{context_extractor2.3} parent=5 // pred_region
        // Predicated region
        $region25: #{context_extractor2.3} parent=23 // pred_check
          %p213 = pneg %p36
        $region26: #{context_extractor2.3} parent=23 // pred_check_branch
          %215 = sbr.rel (%p213) target = $region28
        $region27: #{context_extractor2.3} parent=23 // pred_region
          %s216 = sand.u32 %s26, 1
          %s217 = scalar_lea.sflag [#allocation3], %s216
          %s218 = sand.u32 %s26, 1
          %s219 = smul.addr %s218, 256
          %s220 = scalar_lea.vmem [#allocation2], %s219
          %222 = vsyncadd %s217, 0
          %s223 = smul.addr %s16, 32
          %s224 = smul.addr %s223, 8
          %s225 = scalar_lea.hbm %s0, %s224
          %s226 = sshll.u32 %s225, 4
          %s227 = int_to_ptr.hbm [resolvable:$true] %s226
          %s228 = sshll.u32 %s220, 4
          %s229 = int_to_ptr.vmem [resolvable:$true] %s228
          %234 = dma.hbm_to_vmem [thread:$0]  %s227, 4096, %s229, %s217, 128, 128, 8
        $region28: #{context_extractor2.3} parent=23 // pred_fallthru
          _
      $region24: #{context_extractor2.3} parent=5 // pred_fallthru
        _
      %p235 = scmp.le.s32.totalorder 1, %s16
      %p236 = scmp.lt.s32.totalorder %s16, 3
      %p237 = pnand %p235, %p236
      %p238 = pneg %p237
      // Predicated region
      $region29: #{context_extractor2.3} parent=5 // pred_check
        _
      $region30: #{context_extractor2.3} parent=5 // pred_check_branch
        %240 = sbr.rel (%p237) target = $region32
      $region31: #{context_extractor2.3} parent=5 // pred_region
        %s241 = ssub.s32 %s16, 1
        %s242 = sand.u32 %s29, 1
        %s243 = scalar_lea.sflag [#allocation3], %s242
        %s244 = sand.u32 %s29, 1
        %s245 = smul.addr %s244, 256
        %s246 = scalar_lea.vmem [#allocation2], %s245
        // Predicated region
        $region33: #{context_extractor2.3} parent=31 // pred_check
          %p247 = pneg %p42
        $region34: #{context_extractor2.3} parent=31 // pred_check_branch
          %249 = sbr.rel (%p247) target = $region36
        $region35: #{context_extractor2.3} parent=31 // pred_region
          %251 = dma.done %s243, 4096
        $region36: #{context_extractor2.3} parent=31 // pred_fallthru
          _
        %s252 = sand.u32 %s29, 1
        %s253 = scalar_lea.sflag [#allocation3], %s252
        %s254 = sand.u32 %s29, 1
        %s255 = smul.addr %s254, 256
        %s256 = scalar_lea.vmem [#allocation2], %s255
        %p257 = pneg %p42
        %p258 = pneg %p39
        %p259 = pneg %p63
        %p260 = pneg %p60
        %p261 = pneg %p84
        %p262 = pneg %p81
        %p263 = pneg %p110
        %p264 = pneg %p107
        %p265 = scmp.lt.s32.totalorder %s21, 1
        %s266 = scalar_select %p265, %s21, 1
        %s267 = smul.addr %s266, 32
        %s268 = smul.addr %s267, 4
        %s269 = scalar_lea.vmem %s3, %s268
        %p270 = pneg %p136
        %p271 = pneg %p133
        %p272 = scmp.lt.s32.totalorder %s21, 1
        %s273 = scalar_select %p272, %s21, 1
        %s274 = smul.addr %s273, 32
        %s275 = smul.addr %s274, 4
        %s276 = scalar_lea.vmem %s4, %s275
        %p277 = pneg %p162
        %p278 = pneg %p159
        %p279 = scmp.lt.s32.totalorder %s21, 1
        %s280 = scalar_select %p279, %s21, 1
        %s281 = scalar_lea.vmem %s5, %s280
        %p282 = pneg %p188
        %p283 = pneg %p185
        %p284 = scmp.lt.s32.totalorder %s21, 1
        %s285 = scalar_select %p284, %s21, 1
        %s286 = scalar_lea.vmem %s6, %s285
        %p287 = scmp.lt.s32.totalorder %s21, 1
        %s288 = scalar_select %p287, %s21, 1
        %s289 = smul.addr %s288, 32
        %s290 = smul.addr %s289, 4
        %s291 = scalar_lea.vmem %s3, %s290
        %p292 = scmp.lt.s32.totalorder %s21, 1
        %s293 = scalar_select %p292, %s21, 1
        %s294 = smul.addr %s293, 32
        %s295 = smul.addr %s294, 4
        %s296 = scalar_lea.vmem %s4, %s295
        %p297 = scmp.lt.s32.totalorder %s21, 1
        %s298 = scalar_select %p297, %s21, 1
        %s299 = scalar_lea.vmem %s5, %s298
        %p300 = scmp.lt.s32.totalorder %s21, 1
        %s301 = scalar_select %p300, %s21, 1
        %s302 = scalar_lea.vmem %s6, %s301
        %v303 = vld [vmem:[%s246] sm:$0xff]
        %v304 = vld [vmem:[%s246 + $0x8] sm:$0xff]
        %v305 = vld [vmem:[%s246 + $0x10] sm:$0xff]
        %v306 = vld [vmem:[%s246 + $0x18] sm:$0xff]
        %v307 = vld [vmem:[%s246 + $0x20] sm:$0xff]
        %v308 = vld [vmem:[%s246 + $0x28] sm:$0xff]
        %v309 = vld [vmem:[%s246 + $0x30] sm:$0xff]
        %v310 = vld [vmem:[%s246 + $0x38] sm:$0xff]
        %v311 = vld [vmem:[%s246 + $0x40] sm:$0xff]
        %v312 = vld [vmem:[%s246 + $0x48] sm:$0xff]
        %v313 = vld [vmem:[%s246 + $0x50] sm:$0xff]
        %v314 = vld [vmem:[%s246 + $0x58] sm:$0xff]
        %v315 = vld [vmem:[%s246 + $0x60] sm:$0xff]
        %v316 = vld [vmem:[%s246 + $0x68] sm:$0xff]
        %v317 = vld [vmem:[%s246 + $0x70] sm:$0xff]
        %v318 = vld [vmem:[%s246 + $0x78] sm:$0xff]
        %v319 = vld [vmem:[%s246 + $0x80] sm:$0xff]
        %v320 = vld [vmem:[%s246 + $0x88] sm:$0xff]
        %v321 = vld [vmem:[%s246 + $0x90] sm:$0xff]
        %v322 = vld [vmem:[%s246 + $0x98] sm:$0xff]
        %v323 = vld [vmem:[%s246 + $0xa0] sm:$0xff]
        %v324 = vld [vmem:[%s246 + $0xa8] sm:$0xff]
        %v325 = vld [vmem:[%s246 + $0xb0] sm:$0xff]
        %v326 = vld [vmem:[%s246 + $0xb8] sm:$0xff]
        %v327 = vld [vmem:[%s246 + $0xc0] sm:$0xff]
        %v328 = vld [vmem:[%s246 + $0xc8] sm:$0xff]
        %v329 = vld [vmem:[%s246 + $0xd0] sm:$0xff]
        %v330 = vld [vmem:[%s246 + $0xd8] sm:$0xff]
        %v331 = vld [vmem:[%s246 + $0xe0] sm:$0xff]
        %v332 = vld [vmem:[%s246 + $0xe8] sm:$0xff]
        %v333 = vld [vmem:[%s246 + $0xf0] sm:$0xff]
        %v334 = vld [vmem:[%s246 + $0xf8] sm:$0xff]
        %v335 = vpack.c.bf16 %v304, %v303
        %v336 = vpack.c.bf16 %v306, %v305
        %v337 = vpack.c.bf16 %v308, %v307
        %v338 = vpack.c.bf16 %v310, %v309
        %v339 = vpack.c.bf16 %v312, %v311
        %v340 = vpack.c.bf16 %v314, %v313
        %v341 = vpack.c.bf16 %v316, %v315
        %v342 = vpack.c.bf16 %v318, %v317
        %v343 = vpack.c.bf16 %v320, %v319
        %v344 = vpack.c.bf16 %v322, %v321
        %v345 = vpack.c.bf16 %v324, %v323
        %v346 = vpack.c.bf16 %v326, %v325
        %v347 = vpack.c.bf16 %v328, %v327
        %v348 = vpack.c.bf16 %v330, %v329
        %v349 = vpack.c.bf16 %v332, %v331
        %v350 = vpack.c.bf16 %v334, %v333
        %v351 = vld [vmem:[%s1] sm:$0xff]
        %v352 = vld [vmem:[%s1 + $0x8] sm:$0xff]
        %v353 = vld [vmem:[%s1 + $0x10] sm:$0xff]
        %v354 = vld [vmem:[%s1 + $0x18] sm:$0xff]
        %v355 = vld [vmem:[%s1 + $0x20] sm:$0xff]
        %v356 = vld [vmem:[%s1 + $0x28] sm:$0xff]
        %v357 = vld [vmem:[%s1 + $0x30] sm:$0xff]
        %v358 = vld [vmem:[%s1 + $0x38] sm:$0xff]
        %v359 = vld [vmem:[%s1 + $0x40] sm:$0xff]
        %v360 = vld [vmem:[%s1 + $0x48] sm:$0xff]
        %v361 = vld [vmem:[%s1 + $0x50] sm:$0xff]
        %v362 = vld [vmem:[%s1 + $0x58] sm:$0xff]
        %v363 = vld [vmem:[%s1 + $0x60] sm:$0xff]
        %v364 = vld [vmem:[%s1 + $0x68] sm:$0xff]
        %v365 = vld [vmem:[%s1 + $0x70] sm:$0xff]
        %v366 = vld [vmem:[%s1 + $0x78] sm:$0xff]
        %v367 = vld [vmem:[%s2] sm:$0x3]
        %v369 = vperm.slane %v367, 0
        %v370 = vperm.slane %v367, 1
        %v389 = vunpack.c.l.b16 %v351
        %v390 = vunpack.c.h.b16 %v351
        %v391 = vunpack.c.l.b16 %v352
        %v392 = vunpack.c.h.b16 %v352
        %v393 = vunpack.c.l.b16 %v353
        %v394 = vunpack.c.h.b16 %v353
        %v395 = vunpack.c.l.b16 %v354
        %v396 = vunpack.c.h.b16 %v354
        %v397 = vunpack.c.l.b16 %v355
        %v398 = vunpack.c.h.b16 %v355
        %v399 = vunpack.c.l.b16 %v356
        %v400 = vunpack.c.h.b16 %v356
        %v401 = vunpack.c.l.b16 %v357
        %v402 = vunpack.c.h.b16 %v357
        %v403 = vunpack.c.l.b16 %v358
        %v404 = vunpack.c.h.b16 %v358
        %v405 = vunpack.c.l.b16 %v359
        %v406 = vunpack.c.h.b16 %v359
        %v407 = vunpack.c.l.b16 %v360
        %v408 = vunpack.c.h.b16 %v360
        %v409 = vunpack.c.l.b16 %v361
        %v410 = vunpack.c.h.b16 %v361
        %v411 = vunpack.c.l.b16 %v362
        %v412 = vunpack.c.h.b16 %v362
        %v413 = vunpack.c.l.b16 %v363
        %v414 = vunpack.c.h.b16 %v363
        %v415 = vunpack.c.l.b16 %v364
        %v416 = vunpack.c.h.b16 %v364
        %v417 = vunpack.c.l.b16 %v365
        %v418 = vunpack.c.h.b16 %v365
        %v419 = vunpack.c.l.b16 %v366
        %v420 = vunpack.c.h.b16 %v366
        %v421 = vpack.c.b16 %v391, %v389
        %v422 = vpack.c.b16 %v392, %v390
        %v423 = vpack.c.b16 %v395, %v393
        %v424 = vpack.c.b16 %v396, %v394
        %v425 = vpack.c.b16 %v399, %v397
        %v426 = vpack.c.b16 %v400, %v398
        %v427 = vpack.c.b16 %v403, %v401
        %v428 = vpack.c.b16 %v404, %v402
        %v429 = vpack.c.b16 %v407, %v405
        %v430 = vpack.c.b16 %v408, %v406
        %v431 = vpack.c.b16 %v411, %v409
        %v432 = vpack.c.b16 %v412, %v410
        %v433 = vpack.c.b16 %v415, %v413
        %v434 = vpack.c.b16 %v416, %v414
        %v435 = vpack.c.b16 %v419, %v417
        %v436 = vpack.c.b16 %v420, %v418
        %453 = vmatpush.bf16.msra.mxu0 %v435
        %454 = vmatpush.bf16.msra.mxu0 %v433
        %455 = vmatpush.bf16.msra.mxu0 %v431
        %456 = vmatpush.bf16.msra.mxu0 %v429
        %457 = vmatpush.bf16.msra.mxu0 %v427
        %458 = vmatpush.bf16.msra.mxu0 %v425
        %459 = vmatpush.bf16.msra.mxu0 %v423
        %460 = vmatpush.bf16.msra.mxu0 %v421
        %461 = vmatmul.bf16.gmra.mxu0 %v335
        %v462 = vpop.f32.mrf.mxu0
        %v463 = vadd.f32 %v369, %v462
        %v464 = vpop.f32.mrf.mxu0
        %v465 = vadd.f32 %v369, %v464
        %466 = vmatmul.bf16.gmra.mxu0 %v336
        %v467 = vpop.f32.mrf.mxu0
        %v468 = vadd.f32 %v369, %v467
        %v469 = vpop.f32.mrf.mxu0
        %v470 = vadd.f32 %v369, %v469
        %471 = vmatmul.bf16.gmra.mxu0 %v337
        %v472 = vpop.f32.mrf.mxu0
        %v473 = vadd.f32 %v369, %v472
        %v474 = vpop.f32.mrf.mxu0
        %v475 = vadd.f32 %v369, %v474
        %476 = vmatmul.bf16.gmra.mxu0 %v338
        %v477 = vpop.f32.mrf.mxu0
        %v478 = vadd.f32 %v369, %v477
        %v479 = vpop.f32.mrf.mxu0
        %v480 = vadd.f32 %v369, %v479
        %481 = vmatmul.bf16.gmra.mxu0 %v339
        %v482 = vpop.f32.mrf.mxu0
        %v483 = vadd.f32 %v369, %v482
        %v484 = vpop.f32.mrf.mxu0
        %v485 = vadd.f32 %v369, %v484
        %486 = vmatmul.bf16.gmra.mxu0 %v340
        %v487 = vpop.f32.mrf.mxu0
        %v488 = vadd.f32 %v369, %v487
        %v489 = vpop.f32.mrf.mxu0
        %v490 = vadd.f32 %v369, %v489
        %491 = vmatmul.bf16.gmra.mxu0 %v341
        %v492 = vpop.f32.mrf.mxu0
        %v493 = vadd.f32 %v369, %v492
        %v494 = vpop.f32.mrf.mxu0
        %v495 = vadd.f32 %v369, %v494
        %496 = vmatmul.bf16.gmra.mxu0 %v342
        %v497 = vpop.f32.mrf.mxu0
        %v498 = vadd.f32 %v369, %v497
        %v499 = vpop.f32.mrf.mxu0
        %v500 = vadd.f32 %v369, %v499
        %501 = vmatmul.bf16.gmra.mxu0 %v343
        %v502 = vpop.f32.mrf.mxu0
        %v503 = vadd.f32 %v369, %v502
        %v504 = vpop.f32.mrf.mxu0
        %v505 = vadd.f32 %v369, %v504
        %506 = vmatmul.bf16.gmra.mxu0 %v344
        %v507 = vpop.f32.mrf.mxu0
        %v508 = vadd.f32 %v369, %v507
        %v509 = vpop.f32.mrf.mxu0
        %v510 = vadd.f32 %v369, %v509
        %511 = vmatmul.bf16.gmra.mxu0 %v345
        %v512 = vpop.f32.mrf.mxu0
        %v513 = vadd.f32 %v369, %v512
        %v514 = vpop.f32.mrf.mxu0
        %v515 = vadd.f32 %v369, %v514
        %516 = vmatmul.bf16.gmra.mxu0 %v346
        %v517 = vpop.f32.mrf.mxu0
        %v518 = vadd.f32 %v369, %v517
        %v519 = vpop.f32.mrf.mxu0
        %v520 = vadd.f32 %v369, %v519
        %521 = vmatmul.bf16.gmra.mxu0 %v347
        %v522 = vpop.f32.mrf.mxu0
        %v523 = vadd.f32 %v369, %v522
        %v524 = vpop.f32.mrf.mxu0
        %v525 = vadd.f32 %v369, %v524
        %526 = vmatmul.bf16.gmra.mxu0 %v348
        %v527 = vpop.f32.mrf.mxu0
        %v528 = vadd.f32 %v369, %v527
        %v529 = vpop.f32.mrf.mxu0
        %v530 = vadd.f32 %v369, %v529
        %531 = vmatmul.bf16.gmra.mxu0 %v349
        %v532 = vpop.f32.mrf.mxu0
        %v533 = vadd.f32 %v369, %v532
        %v534 = vpop.f32.mrf.mxu0
        %v535 = vadd.f32 %v369, %v534
        %536 = vmatmul.bf16.gmra.mxu0 %v350
        %v537 = vpop.f32.mrf.mxu0
        %v538 = vadd.f32 %v369, %v537
        %v539 = vpop.f32.mrf.mxu0
        %v540 = vadd.f32 %v369, %v539
        %541 = vdwg.mxu0
        %542 = vmatpush.bf16.msra.mxu0 %v436
        %543 = vmatpush.bf16.msra.mxu0 %v434
        %544 = vmatpush.bf16.msra.mxu0 %v432
        %545 = vmatpush.bf16.msra.mxu0 %v430
        %546 = vmatpush.bf16.msra.mxu0 %v428
        %547 = vmatpush.bf16.msra.mxu0 %v426
        %548 = vmatpush.bf16.msra.mxu0 %v424
        %549 = vmatpush.bf16.msra.mxu0 %v422
        %550 = vmatmul.bf16.gmra.mxu0 %v335
        %v551 = vpop.f32.mrf.mxu0
        %v552 = vadd.f32 %v370, %v551
        %v553 = vpop.f32.mrf.mxu0
        %v554 = vadd.f32 %v370, %v553
        %555 = vmatmul.bf16.gmra.mxu0 %v336
        %v556 = vpop.f32.mrf.mxu0
        %v557 = vadd.f32 %v370, %v556
        %v558 = vpop.f32.mrf.mxu0
        %v559 = vadd.f32 %v370, %v558
        %560 = vmatmul.bf16.gmra.mxu0 %v337
        %v561 = vpop.f32.mrf.mxu0
        %v562 = vadd.f32 %v370, %v561
        %v563 = vpop.f32.mrf.mxu0
        %v564 = vadd.f32 %v370, %v563
        %565 = vmatmul.bf16.gmra.mxu0 %v338
        %v566 = vpop.f32.mrf.mxu0
        %v567 = vadd.f32 %v370, %v566
        %v568 = vpop.f32.mrf.mxu0
        %v569 = vadd.f32 %v370, %v568
        %570 = vmatmul.bf16.gmra.mxu0 %v339
        %v571 = vpop.f32.mrf.mxu0
        %v572 = vadd.f32 %v370, %v571
        %v573 = vpop.f32.mrf.mxu0
        %v574 = vadd.f32 %v370, %v573
        %575 = vmatmul.bf16.gmra.mxu0 %v340
        %v576 = vpop.f32.mrf.mxu0
        %v577 = vadd.f32 %v370, %v576
        %v578 = vpop.f32.mrf.mxu0
        %v579 = vadd.f32 %v370, %v578
        %580 = vmatmul.bf16.gmra.mxu0 %v341
        %v581 = vpop.f32.mrf.mxu0
        %v582 = vadd.f32 %v370, %v581
        %v583 = vpop.f32.mrf.mxu0
        %v584 = vadd.f32 %v370, %v583
        %585 = vmatmul.bf16.gmra.mxu0 %v342
        %v586 = vpop.f32.mrf.mxu0
        %v587 = vadd.f32 %v370, %v586
        %v588 = vpop.f32.mrf.mxu0
        %v589 = vadd.f32 %v370, %v588
        %590 = vmatmul.bf16.gmra.mxu0 %v343
        %v591 = vpop.f32.mrf.mxu0
        %v592 = vadd.f32 %v370, %v591
        %v593 = vpop.f32.mrf.mxu0
        %v594 = vadd.f32 %v370, %v593
        %595 = vmatmul.bf16.gmra.mxu0 %v344
        %v596 = vpop.f32.mrf.mxu0
        %v597 = vadd.f32 %v370, %v596
        %v598 = vpop.f32.mrf.mxu0
        %v599 = vadd.f32 %v370, %v598
        %600 = vmatmul.bf16.gmra.mxu0 %v345
        %v601 = vpop.f32.mrf.mxu0
        %v602 = vadd.f32 %v370, %v601
        %v603 = vpop.f32.mrf.mxu0
        %v604 = vadd.f32 %v370, %v603
        %605 = vmatmul.bf16.gmra.mxu0 %v346
        %v606 = vpop.f32.mrf.mxu0
        %v607 = vadd.f32 %v370, %v606
        %v608 = vpop.f32.mrf.mxu0
        %v609 = vadd.f32 %v370, %v608
        %610 = vmatmul.bf16.gmra.mxu0 %v347
        %v611 = vpop.f32.mrf.mxu0
        %v612 = vadd.f32 %v370, %v611
        %v613 = vpop.f32.mrf.mxu0
        %v614 = vadd.f32 %v370, %v613
        %615 = vmatmul.bf16.gmra.mxu0 %v348
        %v616 = vpop.f32.mrf.mxu0
        %v617 = vadd.f32 %v370, %v616
        %v618 = vpop.f32.mrf.mxu0
        %v619 = vadd.f32 %v370, %v618
        %620 = vmatmul.bf16.gmra.mxu0 %v349
        %v621 = vpop.f32.mrf.mxu0
        %v622 = vadd.f32 %v370, %v621
        %v623 = vpop.f32.mrf.mxu0
        %v624 = vadd.f32 %v370, %v623
        %625 = vmatmul.bf16.gmra.mxu0 %v350
        %v626 = vpop.f32.mrf.mxu0
        %v627 = vadd.f32 %v370, %v626
        %v628 = vpop.f32.mrf.mxu0
        %v629 = vadd.f32 %v370, %v628
        %630 = vdwg.mxu0
        %v631 = vpack.c.bf16 %v463, %v463
        %v632 = vpack.c.bf16 %v465, %v465
        %v633 = vpack.c.bf16 %v468, %v468
        %v634 = vpack.c.bf16 %v470, %v470
        %v635 = vpack.c.bf16 %v473, %v473
        %v636 = vpack.c.bf16 %v475, %v475
        %v637 = vpack.c.bf16 %v478, %v478
        %v638 = vpack.c.bf16 %v480, %v480
        %v639 = vpack.c.bf16 %v483, %v483
        %v640 = vpack.c.bf16 %v485, %v485
        %v641 = vpack.c.bf16 %v488, %v488
        %v642 = vpack.c.bf16 %v490, %v490
        %v643 = vpack.c.bf16 %v493, %v493
        %v644 = vpack.c.bf16 %v495, %v495
        %v645 = vpack.c.bf16 %v498, %v498
        %v646 = vpack.c.bf16 %v500, %v500
        %v647 = vpack.c.bf16 %v503, %v503
        %v648 = vpack.c.bf16 %v505, %v505
        %v649 = vpack.c.bf16 %v508, %v508
        %v650 = vpack.c.bf16 %v510, %v510
        %v651 = vpack.c.bf16 %v513, %v513
        %v652 = vpack.c.bf16 %v515, %v515
        %v653 = vpack.c.bf16 %v518, %v518
        %v654 = vpack.c.bf16 %v520, %v520
        %v655 = vpack.c.bf16 %v523, %v523
        %v656 = vpack.c.bf16 %v525, %v525
        %v657 = vpack.c.bf16 %v528, %v528
        %v658 = vpack.c.bf16 %v530, %v530
        %v659 = vpack.c.bf16 %v533, %v533
        %v660 = vpack.c.bf16 %v535, %v535
        %v661 = vpack.c.bf16 %v538, %v538
        %v662 = vpack.c.bf16 %v540, %v540
        %663 = vst [vmem:[%s291] sm:$0xf] %v631
        %664 = vst [vmem:[%s291 + $0x4] sm:$0xf] %v632
        %665 = vst [vmem:[%s291 + $0x8] sm:$0xf] %v633
        %666 = vst [vmem:[%s291 + $0xc] sm:$0xf] %v634
        %667 = vst [vmem:[%s291 + $0x10] sm:$0xf] %v635
        %668 = vst [vmem:[%s291 + $0x14] sm:$0xf] %v636
        %669 = vst [vmem:[%s291 + $0x18] sm:$0xf] %v637
        %670 = vst [vmem:[%s291 + $0x1c] sm:$0xf] %v638
        %671 = vst [vmem:[%s291 + $0x20] sm:$0xf] %v639
        %672 = vst [vmem:[%s291 + $0x24] sm:$0xf] %v640
        %673 = vst [vmem:[%s291 + $0x28] sm:$0xf] %v641
        %674 = vst [vmem:[%s291 + $0x2c] sm:$0xf] %v642
        %675 = vst [vmem:[%s291 + $0x30] sm:$0xf] %v643
        %676 = vst [vmem:[%s291 + $0x34] sm:$0xf] %v644
        %677 = vst [vmem:[%s291 + $0x38] sm:$0xf] %v645
        %678 = vst [vmem:[%s291 + $0x3c] sm:$0xf] %v646
        %679 = vst [vmem:[%s291 + $0x40] sm:$0xf] %v647
        %680 = vst [vmem:[%s291 + $0x44] sm:$0xf] %v648
        %681 = vst [vmem:[%s291 + $0x48] sm:$0xf] %v649
        %682 = vst [vmem:[%s291 + $0x4c] sm:$0xf] %v650
        %683 = vst [vmem:[%s291 + $0x50] sm:$0xf] %v651
        %684 = vst [vmem:[%s291 + $0x54] sm:$0xf] %v652
        %685 = vst [vmem:[%s291 + $0x58] sm:$0xf] %v653
        %686 = vst [vmem:[%s291 + $0x5c] sm:$0xf] %v654
        %687 = vst [vmem:[%s291 + $0x60] sm:$0xf] %v655
        %688 = vst [vmem:[%s291 + $0x64] sm:$0xf] %v656
        %689 = vst [vmem:[%s291 + $0x68] sm:$0xf] %v657
        %690 = vst [vmem:[%s291 + $0x6c] sm:$0xf] %v658
        %691 = vst [vmem:[%s291 + $0x70] sm:$0xf] %v659
        %692 = vst [vmem:[%s291 + $0x74] sm:$0xf] %v660
        %693 = vst [vmem:[%s291 + $0x78] sm:$0xf] %v661
        %694 = vst [vmem:[%s291 + $0x7c] sm:$0xf] %v662
        %v695 = vpack.c.bf16 %v552, %v552
        %v696 = vpack.c.bf16 %v554, %v554
        %v697 = vpack.c.bf16 %v557, %v557
        %v698 = vpack.c.bf16 %v559, %v559
        %v699 = vpack.c.bf16 %v562, %v562
        %v700 = vpack.c.bf16 %v564, %v564
        %v701 = vpack.c.bf16 %v567, %v567
        %v702 = vpack.c.bf16 %v569, %v569
        %v703 = vpack.c.bf16 %v572, %v572
        %v704 = vpack.c.bf16 %v574, %v574
        %v705 = vpack.c.bf16 %v577, %v577
        %v706 = vpack.c.bf16 %v579, %v579
        %v707 = vpack.c.bf16 %v582, %v582
        %v708 = vpack.c.bf16 %v584, %v584
        %v709 = vpack.c.bf16 %v587, %v587
        %v710 = vpack.c.bf16 %v589, %v589
        %v711 = vpack.c.bf16 %v592, %v592
        %v712 = vpack.c.bf16 %v594, %v594
        %v713 = vpack.c.bf16 %v597, %v597
        %v714 = vpack.c.bf16 %v599, %v599
        %v715 = vpack.c.bf16 %v602, %v602
        %v716 = vpack.c.bf16 %v604, %v604
        %v717 = vpack.c.bf16 %v607, %v607
        %v718 = vpack.c.bf16 %v609, %v609
        %v719 = vpack.c.bf16 %v612, %v612
        %v720 = vpack.c.bf16 %v614, %v614
        %v721 = vpack.c.bf16 %v617, %v617
        %v722 = vpack.c.bf16 %v619, %v619
        %v723 = vpack.c.bf16 %v622, %v622
        %v724 = vpack.c.bf16 %v624, %v624
        %v725 = vpack.c.bf16 %v627, %v627
        %v726 = vpack.c.bf16 %v629, %v629
        %727 = vst [vmem:[%s296] sm:$0xf] %v695
        %728 = vst [vmem:[%s296 + $0x4] sm:$0xf] %v696
        %729 = vst [vmem:[%s296 + $0x8] sm:$0xf] %v697
        %730 = vst [vmem:[%s296 + $0xc] sm:$0xf] %v698
        %731 = vst [vmem:[%s296 + $0x10] sm:$0xf] %v699
        %732 = vst [vmem:[%s296 + $0x14] sm:$0xf] %v700
        %733 = vst [vmem:[%s296 + $0x18] sm:$0xf] %v701
        %734 = vst [vmem:[%s296 + $0x1c] sm:$0xf] %v702
        %735 = vst [vmem:[%s296 + $0x20] sm:$0xf] %v703
        %736 = vst [vmem:[%s296 + $0x24] sm:$0xf] %v704
        %737 = vst [vmem:[%s296 + $0x28] sm:$0xf] %v705
        %738 = vst [vmem:[%s296 + $0x2c] sm:$0xf] %v706
        %739 = vst [vmem:[%s296 + $0x30] sm:$0xf] %v707
        %740 = vst [vmem:[%s296 + $0x34] sm:$0xf] %v708
        %741 = vst [vmem:[%s296 + $0x38] sm:$0xf] %v709
        %742 = vst [vmem:[%s296 + $0x3c] sm:$0xf] %v710
        %743 = vst [vmem:[%s296 + $0x40] sm:$0xf] %v711
        %744 = vst [vmem:[%s296 + $0x44] sm:$0xf] %v712
        %745 = vst [vmem:[%s296 + $0x48] sm:$0xf] %v713
        %746 = vst [vmem:[%s296 + $0x4c] sm:$0xf] %v714
        %747 = vst [vmem:[%s296 + $0x50] sm:$0xf] %v715
        %748 = vst [vmem:[%s296 + $0x54] sm:$0xf] %v716
        %749 = vst [vmem:[%s296 + $0x58] sm:$0xf] %v717
        %750 = vst [vmem:[%s296 + $0x5c] sm:$0xf] %v718
        %751 = vst [vmem:[%s296 + $0x60] sm:$0xf] %v719
        %752 = vst [vmem:[%s296 + $0x64] sm:$0xf] %v720
        %753 = vst [vmem:[%s296 + $0x68] sm:$0xf] %v721
        %754 = vst [vmem:[%s296 + $0x6c] sm:$0xf] %v722
        %755 = vst [vmem:[%s296 + $0x70] sm:$0xf] %v723
        %756 = vst [vmem:[%s296 + $0x74] sm:$0xf] %v724
        %757 = vst [vmem:[%s296 + $0x78] sm:$0xf] %v725
        %758 = vst [vmem:[%s296 + $0x7c] sm:$0xf] %v726
        %v759 = vmax.f32 %v303, %v307
        %v760 = vmax.f32 %v304, %v308
        %v761 = vmax.f32 %v305, %v309
        %v762 = vmax.f32 %v306, %v310
        %v763 = vmax.f32 %v759, %v311
        %v764 = vmax.f32 %v760, %v312
        %v765 = vmax.f32 %v761, %v313
        %v766 = vmax.f32 %v762, %v314
        %v767 = vmax.f32 %v763, %v315
        %v768 = vmax.f32 %v764, %v316
        %v769 = vmax.f32 %v765, %v317
        %v770 = vmax.f32 %v766, %v318
        %v771 = vmax.f32 %v767, %v319
        %v772 = vmax.f32 %v768, %v320
        %v773 = vmax.f32 %v769, %v321
        %v774 = vmax.f32 %v770, %v322
        %v775 = vmax.f32 %v771, %v323
        %v776 = vmax.f32 %v772, %v324
        %v777 = vmax.f32 %v773, %v325
        %v778 = vmax.f32 %v774, %v326
        %v779 = vmax.f32 %v775, %v327
        %v780 = vmax.f32 %v776, %v328
        %v781 = vmax.f32 %v777, %v329
        %v782 = vmax.f32 %v778, %v330
        %v783 = vmax.f32 %v779, %v331
        %v784 = vmax.f32 %v780, %v332
        %v785 = vmax.f32 %v781, %v333
        %v786 = vmax.f32 %v782, %v334
        %v787 = vmax.f32 %v783, %v784
        %v788 = vmax.f32 %v785, %v786
        %v789 = vmax.f32 %v787, %v788
        %v790 = vrot.slane %v789, 4
        %v791 = vmax.f32 %v789, %v790
        %v792 = vrot.slane %v791, 2
        %v793 = vmax.f32 %v791, %v792
        %v794 = vrot.slane %v793, 1
        %v795 = vmax.f32 %v793, %v794
        %796 = vst [vmem:[%s299] sm:$0x1] %v795
        %v797 = vmin.f32 %v303, %v307
        %v798 = vmin.f32 %v304, %v308
        %v799 = vmin.f32 %v305, %v309
        %v800 = vmin.f32 %v306, %v310
        %v801 = vmin.f32 %v797, %v311
        %v802 = vmin.f32 %v798, %v312
        %v803 = vmin.f32 %v799, %v313
        %v804 = vmin.f32 %v800, %v314
        %v805 = vmin.f32 %v801, %v315
        %v806 = vmin.f32 %v802, %v316
        %v807 = vmin.f32 %v803, %v317
        %v808 = vmin.f32 %v804, %v318
        %v809 = vmin.f32 %v805, %v319
        %v810 = vmin.f32 %v806, %v320
        %v811 = vmin.f32 %v807, %v321
        %v812 = vmin.f32 %v808, %v322
        %v813 = vmin.f32 %v809, %v323
        %v814 = vmin.f32 %v810, %v324
        %v815 = vmin.f32 %v811, %v325
        %v816 = vmin.f32 %v812, %v326
        %v817 = vmin.f32 %v813, %v327
        %v818 = vmin.f32 %v814, %v328
        %v819 = vmin.f32 %v815, %v329
        %v820 = vmin.f32 %v816, %v330
        %v821 = vmin.f32 %v817, %v331
        %v822 = vmin.f32 %v818, %v332
        %v823 = vmin.f32 %v819, %v333
        %v824 = vmin.f32 %v820, %v334
        %v825 = vmin.f32 %v821, %v822
        %v826 = vmin.f32 %v823, %v824
        %v827 = vmin.f32 %v825, %v826
        %v828 = vrot.slane %v827, 4
        %v829 = vmin.f32 %v827, %v828
        %v830 = vrot.slane %v829, 2
        %v831 = vmin.f32 %v829, %v830
        %v832 = vrot.slane %v831, 1
        %v833 = vmin.f32 %v831, %v832
        %834 = vst [vmem:[%s302] sm:$0x1] %v833
        %p835 = scmp.lt.s32.totalorder %s21, 1
        %s836 = scalar_select %p835, %s21, 1
        %s837 = smul.addr %s836, 32
        %s838 = smul.addr %s837, 4
        %s839 = scalar_lea.vmem %s3, %s838
        %p840 = scmp.lt.s32.totalorder %s21, 1
        %s841 = scalar_select %p840, %s21, 1
        %s842 = smul.addr %s841, 32
        %s843 = smul.addr %s842, 4
        %s844 = scalar_lea.vmem %s4, %s843
        %p845 = scmp.lt.s32.totalorder %s21, 1
        %s846 = scalar_select %p845, %s21, 1
        %s847 = scalar_lea.vmem %s5, %s846
        %p848 = scmp.lt.s32.totalorder %s21, 1
        %s849 = scalar_select %p848, %s21, 1
        %s850 = scalar_lea.vmem %s6, %s849
        // Predicated region
        $region37: #{context_extractor2.3} parent=31 // pred_check
          %p851 = pneg %p107
        $region38: #{context_extractor2.3} parent=31 // pred_check_branch
          %853 = sbr.rel (%p851) target = $region40
        $region39: #{context_extractor2.3} parent=31 // pred_region
          _
        $region40: #{context_extractor2.3} parent=31 // pred_fallthru
          _
        // Predicated region
        $region41: #{context_extractor2.3} parent=31 // pred_check
          %p854 = pneg %p133
        $region42: #{context_extractor2.3} parent=31 // pred_check_branch
          %856 = sbr.rel (%p854) target = $region44
        $region43: #{context_extractor2.3} parent=31 // pred_region
          _
        $region44: #{context_extractor2.3} parent=31 // pred_fallthru
          _
        // Predicated region
        $region45: #{context_extractor2.3} parent=31 // pred_check
          %p857 = pneg %p159
        $region46: #{context_extractor2.3} parent=31 // pred_check_branch
          %859 = sbr.rel (%p857) target = $region48
        $region47: #{context_extractor2.3} parent=31 // pred_region
          _
        $region48: #{context_extractor2.3} parent=31 // pred_fallthru
          _
        // Predicated region
        $region49: #{context_extractor2.3} parent=31 // pred_check
          %p860 = pneg %p185
        $region50: #{context_extractor2.3} parent=31 // pred_check_branch
          %862 = sbr.rel (%p860) target = $region52
        $region51: #{context_extractor2.3} parent=31 // pred_region
          _
        $region52: #{context_extractor2.3} parent=31 // pred_fallthru
          _
      $region32: #{context_extractor2.3} parent=5 // pred_fallthru
        _
      %p863 = scmp.le.s32.totalorder 2, %s16
      // Predicated region
      $region53: #{context_extractor2.3} parent=5 // pred_check
        %p864 = pneg %p863
      $region54: #{context_extractor2.3} parent=5 // pred_check_branch
        %866 = sbr.rel (%p864) target = $region56
      $region55: #{context_extractor2.3} parent=5 // pred_region
        %s867 = ssub.s32 %s16, 2
        // Predicated region
        $region57: #{context_extractor2.3} parent=55 // pred_check
          %p868 = pneg %p113
        $region58: #{context_extractor2.3} parent=55 // pred_check_branch
          %870 = sbr.rel (%p868) target = $region60
        $region59: #{context_extractor2.3} parent=55 // pred_region
          %p871 = scmp.lt.s32.totalorder %s22, 1
          %s872 = scalar_select %p871, %s22, 1
          %s873 = smul.addr %s872, 32
          %s874 = smul.addr %s873, 4
          %s875 = scalar_lea.vmem %s3, %s874
        $region60: #{context_extractor2.3} parent=55 // pred_fallthru
          _
        // Predicated region
        $region61: #{context_extractor2.3} parent=55 // pred_check
          %p876 = pneg %p139
        $region62: #{context_extractor2.3} parent=55 // pred_check_branch
          %878 = sbr.rel (%p876) target = $region64
        $region63: #{context_extractor2.3} parent=55 // pred_region
          %p879 = scmp.lt.s32.totalorder %s22, 1
          %s880 = scalar_select %p879, %s22, 1
          %s881 = smul.addr %s880, 32
          %s882 = smul.addr %s881, 4
          %s883 = scalar_lea.vmem %s4, %s882
        $region64: #{context_extractor2.3} parent=55 // pred_fallthru
          _
        // Predicated region
        $region65: #{context_extractor2.3} parent=55 // pred_check
          %p884 = pneg %p165
        $region66: #{context_extractor2.3} parent=55 // pred_check_branch
          %886 = sbr.rel (%p884) target = $region68
        $region67: #{context_extractor2.3} parent=55 // pred_region
          %p887 = scmp.lt.s32.totalorder %s22, 1
          %s888 = scalar_select %p887, %s22, 1
          %s889 = scalar_lea.vmem %s5, %s888
        $region68: #{context_extractor2.3} parent=55 // pred_fallthru
          _
        // Predicated region
        $region69: #{context_extractor2.3} parent=55 // pred_check
          %p890 = pneg %p191
        $region70: #{context_extractor2.3} parent=55 // pred_check_branch
          %892 = sbr.rel (%p890) target = $region72
        $region71: #{context_extractor2.3} parent=55 // pred_region
          %p893 = scmp.lt.s32.totalorder %s22, 1
          %s894 = scalar_select %p893, %s22, 1
          %s895 = scalar_lea.vmem %s6, %s894
        $region72: #{context_extractor2.3} parent=55 // pred_fallthru
          _
      $region56: #{context_extractor2.3} parent=5 // pred_fallthru
        _
    $region6: #{context_extractor2.3} parent=1 // loop_footer
      %s20 = sadd.s32 1, %s16
    $region7: #{context_extractor2.3} parent=1 // loop_footer_branch
      %15 = sbr.rel target = $region3
    $region8: #{context_extractor2.3} parent=1 // loop_exit
      _
    %896 = vsyncpa [#allocation3], 1
    %s897 = scalar_lea.sflag [#allocation3], 1
    %898 = vsyncpa %s897, 1

// kernel: context_extractor2.4
$region0: #{context_extractor2.4}
  #allocation0 [shape = 'u32[]', space=smem, size = 0x4, offset = 0x4, fixed_abs, tag = 'smem constant byte address 0x4 - core index']
  #allocation1 [shape = 'u32[72,128]{1,0:T(1,128)}', space=vmem, size = 0x9000, scoped, tag = 'internal scratch']
  #allocation2 [shape = 'f32[256,1]{1,0:T(8,128)}', space=vmem, size = 0x20000, scoped, tag = 'scratch operand']
  %s0 = inlined_call_operand.vmem [shape: bf16[2,256,128], index: 0, kind: input, shape index: {}]
  %s1 = inlined_call_operand.vmem [shape: bf16[2,256,128], index: 1, kind: input, shape index: {}]
  %s2 = inlined_call_operand.hbm [shape: f32[2,256,128], index: 2, kind: input, shape index: {}]
  %s3 = inlined_call_operand.vmem [shape: f32[2,1,128], index: 3, kind: output, shape index: {}]
  %s4 = sld [smem:[#allocation0]]
  $region57: #{context_extractor2.4} parent=0
    _
  %s6 = ssub.s32 1, %s4
  %s7 = scalar_select 0, %s6, %s4
  $region1: #{context_extractor2.4} parent=0
    #allocation3 [shape = 'u8[262144]{0}', space=vmem, size = 0x40000, scoped, tag = 'input window, operand 2']
    #allocation4 [shape = 's32[2]{0}', space=sflag, size = 0x8, scoped, tag = 'scoped memory for context_extractor2.4']
    %8 = vsyncpa [#allocation4], 0
    %s9 = scalar_lea.sflag [#allocation4], 1
    %10 = vsyncpa %s9, 0
    loop: start=0, step=1, limit=6
    $region2: #{context_extractor2.4} parent=1 // loop_pre_header
      _
    $region3: #{context_extractor2.4} parent=1 // loop_header
      %s12 = sphi 0, %s16
      %p13 = scmp.ge.s32.totalorder %s12, 6
      %s19 = sphi 0, %s31
      %s20 = sphi 0, %s27
      %s21 = sphi 0, %s19
      %s22 = sphi 0, %s20
      %s23 = sphi 0, %s21
      %s24 = sphi 0, %s22
      %s34 = sphi 0, %s36
      %s37 = sphi 0, %s34
      %s38 = sphi 0, %s37
      %s54 = sphi 0, %s38
      %s58 = sphi 0, %s58
      %s60 = sphi 0, %s58
      %s61 = sphi 0, %s60
      %s75 = sphi 0, %s61
      %s81 = sphi 0, %s83
      %s84 = sphi 0, %s81
      %s85 = sphi 0, %s84
      %s101 = sphi 0, %s85
      %s107 = sphi 0, %s109
      %s110 = sphi 0, %s107
      %s111 = sphi 0, %s110
      %s127 = sphi 0, %s111
    $region4: #{context_extractor2.4} parent=1 // loop_header_branch
      %15 = sbr.rel (%p13) target = $region8
    $region5: #{context_extractor2.4} parent=1 // loop_body
      %s17 = ssub.s32 %s12, 1
      %s18 = ssub.s32 %s12, 2
      %s25 = sadd.s32 1, %s20
      %p26 = scmp.ge.s32.totalorder %s25, 2
      %s27 = scalar_select %p26, 0, %s25
      %s28 = sadd.s32 1, %s19
      %s29 = scalar_select %p26, %s28, %s19
      %p30 = scmp.ge.s32.totalorder %s29, 2
      %s31 = scalar_select %p30, 0, %s29
      %s32 = ssub.s32 %s19, %s31
      %p33 = scmp.eq.s32.totalorder %s32, 0
      %s35 = sadd.s32 %s34, 1
      %s36 = scalar_select %p33, %s34, %s35
      %p39 = pneg %p33
      %p40 = scmp.eq.s32.totalorder %s12, 3
      %p41 = por %p39, %p40
      %p42 = scmp.ne.s32.totalorder %s34, %s37
      %p43 = scmp.eq.s32.totalorder %s12, 0
      %p44 = por %p42, %p43
      %p45 = scmp.ne.s32.totalorder %s34, %s37
      %p46 = scmp.eq.s32.totalorder %s17, 3
      %p47 = por %p45, %p46
      %p48 = scmp.ne.s32.totalorder %s37, %s38
      %p49 = scmp.eq.s32.totalorder %s17, 0
      %p50 = por %p48, %p49
      %p51 = scmp.ne.s32.totalorder %s37, %s38
      %p52 = scmp.eq.s32.totalorder %s18, 3
      %p53 = por %p51, %p52
      %p55 = scmp.ne.s32.totalorder %s38, %s54
      %p56 = scmp.eq.s32.totalorder %s18, 0
      %p57 = por %p55, %p56
      %s59 = sadd.s32 %s58, 1
      %p62 = scmp.eq.s32.totalorder %s12, 3
      %p63 = scmp.ne.s32.totalorder %s58, %s60
      %p64 = scmp.eq.s32.totalorder %s12, 0
      %p65 = por %p63, %p64
      %p66 = scmp.ne.s32.totalorder %s58, %s60
      %p67 = scmp.eq.s32.totalorder %s17, 3
      %p68 = por %p66, %p67
      %p69 = scmp.ne.s32.totalorder %s60, %s61
      %p70 = scmp.eq.s32.totalorder %s17, 0
      %p71 = por %p69, %p70
      %p72 = scmp.ne.s32.totalorder %s60, %s61
      %p73 = scmp.eq.s32.totalorder %s18, 3
      %p74 = por %p72, %p73
      %p76 = scmp.ne.s32.totalorder %s61, %s75
      %p77 = scmp.eq.s32.totalorder %s18, 0
      %p78 = por %p76, %p77
      %s79 = ssub.s32 %s19, %s31
      %p80 = scmp.eq.s32.totalorder %s79, 0
      %s82 = sadd.s32 %s81, 1
      %s83 = scalar_select %p80, %s81, %s82
      %p86 = pneg %p80
      %p87 = scmp.eq.s32.totalorder %s12, 3
      %p88 = por %p86, %p87
      %p89 = scmp.ne.s32.totalorder %s81, %s84
      %p90 = scmp.eq.s32.totalorder %s12, 0
      %p91 = por %p89, %p90
      %p92 = scmp.ne.s32.totalorder %s81, %s84
      %p93 = scmp.eq.s32.totalorder %s17, 3
      %p94 = por %p92, %p93
      %p95 = scmp.ne.s32.totalorder %s84, %s85
      %p96 = scmp.eq.s32.totalorder %s17, 0
      %p97 = por %p95, %p96
      %p98 = scmp.ne.s32.totalorder %s84, %s85
      %p99 = scmp.eq.s32.totalorder %s18, 3
      %p100 = por %p98, %p99
      %p102 = scmp.ne.s32.totalorder %s85, %s101
      %p103 = scmp.eq.s32.totalorder %s18, 0
      %p104 = por %p102, %p103
      %s105 = ssub.s32 %s19, %s31
      %p106 = scmp.eq.s32.totalorder %s105, 0
      %s108 = sadd.s32 %s107, 1
      %s109 = scalar_select %p106, %s107, %s108
      %p112 = pneg %p106
      %p113 = scmp.eq.s32.totalorder %s12, 3
      %p114 = por %p112, %p113
      %p115 = scmp.ne.s32.totalorder %s107, %s110
      %p116 = scmp.eq.s32.totalorder %s12, 0
      %p117 = por %p115, %p116
      %p118 = scmp.ne.s32.totalorder %s107, %s110
      %p119 = scmp.eq.s32.totalorder %s17, 3
      %p120 = por %p118, %p119
      %p121 = scmp.ne.s32.totalorder %s110, %s111
      %p122 = scmp.eq.s32.totalorder %s17, 0
      %p123 = por %p121, %p122
      %p124 = scmp.ne.s32.totalorder %s110, %s111
      %p125 = scmp.eq.s32.totalorder %s18, 3
      %p126 = por %p124, %p125
      %p128 = scmp.ne.s32.totalorder %s111, %s127
      %p129 = scmp.eq.s32.totalorder %s18, 0
      %p130 = por %p128, %p129
      %p131 = scmp.le.s32.totalorder 1, %s12
      %p132 = scmp.lt.s32.totalorder %s12, 5
      %p133 = pnand %p131, %p132
      %p134 = pneg %p133
      // Predicated region
      $region9: #{context_extractor2.4} parent=5 // pred_check
        _
      $region10: #{context_extractor2.4} parent=5 // pred_check_branch
        %136 = sbr.rel (%p133) target = $region12
      $region11: #{context_extractor2.4} parent=5 // pred_region
        %s137 = ssub.s32 %s12, 1
        // Predicated region
        $region13: #{context_extractor2.4} parent=11 // pred_check
          %p138 = pneg %p71
        $region14: #{context_extractor2.4} parent=11 // pred_check_branch
          %140 = sbr.rel (%p138) target = $region16
        $region15: #{context_extractor2.4} parent=11 // pred_region
          _
        $region16: #{context_extractor2.4} parent=11 // pred_fallthru
          _
      $region12: #{context_extractor2.4} parent=5 // pred_fallthru
        _
      %p141 = scmp.lt.s32.totalorder %s12, 4
      // Predicated region
      $region17: #{context_extractor2.4} parent=5 // pred_check
        %p142 = pneg %p141
      $region18: #{context_extractor2.4} parent=5 // pred_check_branch
        %144 = sbr.rel (%p142) target = $region20
      $region19: #{context_extractor2.4} parent=5 // pred_region
        // Predicated region
        $region21: #{context_extractor2.4} parent=19 // pred_check
          %p145 = pneg %p44
        $region22: #{context_extractor2.4} parent=19 // pred_check_branch
          %147 = sbr.rel (%p145) target = $region24
        $region23: #{context_extractor2.4} parent=19 // pred_region
          %p148 = scmp.lt.s32.totalorder %s19, 1
          %s149 = scalar_select %p148, %s19, 1
          %s150 = smul.addr %s149, 32
          %s151 = smul.addr %s150, 4
          %s152 = scalar_lea.vmem %s0, %s151
        $region24: #{context_extractor2.4} parent=19 // pred_fallthru
          _
        // Predicated region
        $region25: #{context_extractor2.4} parent=19 // pred_check
          %p153 = pneg %p91
        $region26: #{context_extractor2.4} parent=19 // pred_check_branch
          %155 = sbr.rel (%p153) target = $region28
        $region27: #{context_extractor2.4} parent=19 // pred_region
          %s156 = sand.u32 %s81, 1
          %s157 = scalar_lea.sflag [#allocation4], %s156
          %s158 = sand.u32 %s81, 1
          %s159 = smul.addr %s158, 256
          %s160 = scalar_lea.vmem [#allocation3], %s159
          %162 = vsyncadd %s157, 0
          %s163 = smul.addr %s19, 32
          %s164 = smul.addr %s163, 8
          %s165 = scalar_lea.hbm %s2, %s164
          %s166 = sshll.u32 %s165, 4
          %s167 = int_to_ptr.hbm [resolvable:$true] %s166
          %s168 = sshll.u32 %s160, 4
          %s169 = int_to_ptr.vmem [resolvable:$true] %s168
          %174 = dma.hbm_to_vmem [thread:$0]  %s167, 4096, %s169, %s157, 128, 128, 8
        $region28: #{context_extractor2.4} parent=19 // pred_fallthru
          _
      $region20: #{context_extractor2.4} parent=5 // pred_fallthru
        _
      %p175 = scmp.le.s32.totalorder 1, %s12
      %p176 = scmp.lt.s32.totalorder %s12, 5
      %p177 = pnand %p175, %p176
      %p178 = pneg %p177
      // Predicated region
      $region29: #{context_extractor2.4} parent=5 // pred_check
        _
      $region30: #{context_extractor2.4} parent=5 // pred_check_branch
        %180 = sbr.rel (%p177) target = $region32
      $region31: #{context_extractor2.4} parent=5 // pred_region
        %s181 = ssub.s32 %s12, 1
        %s182 = sand.u32 %s84, 1
        %s183 = scalar_lea.sflag [#allocation4], %s182
        %s184 = sand.u32 %s84, 1
        %s185 = smul.addr %s184, 256
        %s186 = scalar_lea.vmem [#allocation3], %s185
        // Predicated region
        $region33: #{context_extractor2.4} parent=31 // pred_check
          %p187 = pneg %p97
        $region34: #{context_extractor2.4} parent=31 // pred_check_branch
          %189 = sbr.rel (%p187) target = $region36
        $region35: #{context_extractor2.4} parent=31 // pred_region
          %191 = dma.done %s183, 4096
        $region36: #{context_extractor2.4} parent=31 // pred_fallthru
          _
        %p192 = scmp.lt.s32.totalorder %s21, 1
        %s193 = scalar_select %p192, %s21, 1
        %s194 = smul.addr %s193, 32
        %s195 = smul.addr %s194, 4
        %s196 = scalar_lea.vmem %s0, %s195
        %p197 = pneg %p50
        %p198 = pneg %p47
        %p199 = pneg %p71
        %p200 = pneg %p68
        %s201 = sand.u32 %s84, 1
        %s202 = scalar_lea.sflag [#allocation4], %s201
        %s203 = sand.u32 %s84, 1
        %s204 = smul.addr %s203, 256
        %s205 = scalar_lea.vmem [#allocation3], %s204
        %p206 = pneg %p97
        %p207 = pneg %p94
        %p208 = pneg %p123
        %p209 = pneg %p120
        %p210 = scmp.lt.s32.totalorder %s21, 1
        %s211 = scalar_select %p210, %s21, 1
        %s212 = scalar_lea.vmem %s3, %s211
        %p213 = scmp.lt.s32.totalorder %s21, 1
        %s214 = scalar_select %p213, %s21, 1
        %s215 = smul.addr %s214, 32
        %s216 = smul.addr %s215, 4
        %s217 = scalar_lea.vmem %s0, %s216
        %p218 = scmp.lt.s32.totalorder %s21, 1
        %s219 = scalar_select %p218, %s21, 1
        %s220 = scalar_lea.vmem %s3, %s219
        %s221 = smul.u32 %s22, 32
        %s222 = smul.addr %s221, 4
        %s223 = scalar_lea.vmem %s1, %s222
        %v224 = vld [vmem:[%s223] sm:$0xf]
        %v225 = vld [vmem:[%s223 + $0x4] sm:$0xf]
        %v226 = vld [vmem:[%s223 + $0x8] sm:$0xf]
        %v227 = vld [vmem:[%s223 + $0xc] sm:$0xf]
        %v228 = vld [vmem:[%s223 + $0x10] sm:$0xf]
        %v229 = vld [vmem:[%s223 + $0x14] sm:$0xf]
        %v230 = vld [vmem:[%s223 + $0x18] sm:$0xf]
        %v231 = vld [vmem:[%s223 + $0x1c] sm:$0xf]
        %v232 = vld [vmem:[%s223 + $0x20] sm:$0xf]
        %v233 = vld [vmem:[%s223 + $0x24] sm:$0xf]
        %v234 = vld [vmem:[%s223 + $0x28] sm:$0xf]
        %v235 = vld [vmem:[%s223 + $0x2c] sm:$0xf]
        %v236 = vld [vmem:[%s223 + $0x30] sm:$0xf]
        %v237 = vld [vmem:[%s223 + $0x34] sm:$0xf]
        %v238 = vld [vmem:[%s223 + $0x38] sm:$0xf]
        %v239 = vld [vmem:[%s223 + $0x3c] sm:$0xf]
        %v240 = vld [vmem:[%s223 + $0x40] sm:$0xf]
        %v241 = vld [vmem:[%s223 + $0x44] sm:$0xf]
        %v242 = vld [vmem:[%s223 + $0x48] sm:$0xf]
        %v243 = vld [vmem:[%s223 + $0x4c] sm:$0xf]
        %v244 = vld [vmem:[%s223 + $0x50] sm:$0xf]
        %v245 = vld [vmem:[%s223 + $0x54] sm:$0xf]
        %v246 = vld [vmem:[%s223 + $0x58] sm:$0xf]
        %v247 = vld [vmem:[%s223 + $0x5c] sm:$0xf]
        %v248 = vld [vmem:[%s223 + $0x60] sm:$0xf]
        %v249 = vld [vmem:[%s223 + $0x64] sm:$0xf]
        %v250 = vld [vmem:[%s223 + $0x68] sm:$0xf]
        %v251 = vld [vmem:[%s223 + $0x6c] sm:$0xf]
        %v252 = vld [vmem:[%s223 + $0x70] sm:$0xf]
        %v253 = vld [vmem:[%s223 + $0x74] sm:$0xf]
        %v254 = vld [vmem:[%s223 + $0x78] sm:$0xf]
        %v255 = vld [vmem:[%s223 + $0x7c] sm:$0xf]
        %v256 = vld [vmem:[%s217] sm:$0xf]
        %v257 = vld [vmem:[%s217 + $0x4] sm:$0xf]
        %v258 = vld [vmem:[%s217 + $0x8] sm:$0xf]
        %v259 = vld [vmem:[%s217 + $0xc] sm:$0xf]
        %v260 = vld [vmem:[%s217 + $0x10] sm:$0xf]
        %v261 = vld [vmem:[%s217 + $0x14] sm:$0xf]
        %v262 = vld [vmem:[%s217 + $0x18] sm:$0xf]
        %v263 = vld [vmem:[%s217 + $0x1c] sm:$0xf]
        %v264 = vld [vmem:[%s217 + $0x20] sm:$0xf]
        %v265 = vld [vmem:[%s217 + $0x24] sm:$0xf]
        %v266 = vld [vmem:[%s217 + $0x28] sm:$0xf]
        %v267 = vld [vmem:[%s217 + $0x2c] sm:$0xf]
        %v268 = vld [vmem:[%s217 + $0x30] sm:$0xf]
        %v269 = vld [vmem:[%s217 + $0x34] sm:$0xf]
        %v270 = vld [vmem:[%s217 + $0x38] sm:$0xf]
        %v271 = vld [vmem:[%s217 + $0x3c] sm:$0xf]
        %v272 = vld [vmem:[%s217 + $0x40] sm:$0xf]
        %v273 = vld [vmem:[%s217 + $0x44] sm:$0xf]
        %v274 = vld [vmem:[%s217 + $0x48] sm:$0xf]
        %v275 = vld [vmem:[%s217 + $0x4c] sm:$0xf]
        %v276 = vld [vmem:[%s217 + $0x50] sm:$0xf]
        %v277 = vld [vmem:[%s217 + $0x54] sm:$0xf]
        %v278 = vld [vmem:[%s217 + $0x58] sm:$0xf]
        %v279 = vld [vmem:[%s217 + $0x5c] sm:$0xf]
        %v280 = vld [vmem:[%s217 + $0x60] sm:$0xf]
        %v281 = vld [vmem:[%s217 + $0x64] sm:$0xf]
        %v282 = vld [vmem:[%s217 + $0x68] sm:$0xf]
        %v283 = vld [vmem:[%s217 + $0x6c] sm:$0xf]
        %v284 = vld [vmem:[%s217 + $0x70] sm:$0xf]
        %v285 = vld [vmem:[%s217 + $0x74] sm:$0xf]
        %v286 = vld [vmem:[%s217 + $0x78] sm:$0xf]
        %v287 = vld [vmem:[%s217 + $0x7c] sm:$0xf]
        %v320 = vunpack.c.l.b16 %v256
        %v321 = vunpack.c.l.b16 %v257
        %v322 = vunpack.c.l.b16 %v258
        %v323 = vunpack.c.l.b16 %v259
        %v324 = vunpack.c.l.b16 %v260
        %v325 = vunpack.c.l.b16 %v261
        %v326 = vunpack.c.l.b16 %v262
        %v327 = vunpack.c.l.b16 %v263
        %v328 = vunpack.c.l.b16 %v264
        %v329 = vunpack.c.l.b16 %v265
        %v330 = vunpack.c.l.b16 %v266
        %v331 = vunpack.c.l.b16 %v267
        %v332 = vunpack.c.l.b16 %v268
        %v333 = vunpack.c.l.b16 %v269
        %v334 = vunpack.c.l.b16 %v270
        %v335 = vunpack.c.l.b16 %v271
        %v336 = vunpack.c.l.b16 %v272
        %v337 = vunpack.c.l.b16 %v273
        %v338 = vunpack.c.l.b16 %v274
        %v339 = vunpack.c.l.b16 %v275
        %v340 = vunpack.c.l.b16 %v276
        %v341 = vunpack.c.l.b16 %v277
        %v342 = vunpack.c.l.b16 %v278
        %v343 = vunpack.c.l.b16 %v279
        %v344 = vunpack.c.l.b16 %v280
        %v345 = vunpack.c.l.b16 %v281
        %v346 = vunpack.c.l.b16 %v282
        %v347 = vunpack.c.l.b16 %v283
        %v348 = vunpack.c.l.b16 %v284
        %v349 = vunpack.c.l.b16 %v285
        %v350 = vunpack.c.l.b16 %v286
        %v351 = vunpack.c.l.b16 %v287
        %v352 = vpack.c.b16 %v321, %v320
        %v353 = vpack.c.b16 %v323, %v322
        %v354 = vpack.c.b16 %v325, %v324
        %v355 = vpack.c.b16 %v327, %v326
        %v356 = vpack.c.b16 %v329, %v328
        %v357 = vpack.c.b16 %v331, %v330
        %v358 = vpack.c.b16 %v333, %v332
        %v359 = vpack.c.b16 %v335, %v334
        %v360 = vpack.c.b16 %v337, %v336
        %v361 = vpack.c.b16 %v339, %v338
        %v362 = vpack.c.b16 %v341, %v340
        %v363 = vpack.c.b16 %v343, %v342
        %v364 = vpack.c.b16 %v345, %v344
        %v365 = vpack.c.b16 %v347, %v346
        %v366 = vpack.c.b16 %v349, %v348
        %v367 = vpack.c.b16 %v351, %v350
        %v416 = vunpack.c.l.b16 %v224
        %v417 = vunpack.c.l.b16 %v225
        %v418 = vunpack.c.l.b16 %v226
        %v419 = vunpack.c.l.b16 %v227
        %v420 = vunpack.c.l.b16 %v228
        %v421 = vunpack.c.l.b16 %v229
        %v422 = vunpack.c.l.b16 %v230
        %v423 = vunpack.c.l.b16 %v231
        %v424 = vunpack.c.l.b16 %v232
        %v425 = vunpack.c.l.b16 %v233
        %v426 = vunpack.c.l.b16 %v234
        %v427 = vunpack.c.l.b16 %v235
        %v428 = vunpack.c.l.b16 %v236
        %v429 = vunpack.c.l.b16 %v237
        %v430 = vunpack.c.l.b16 %v238
        %v431 = vunpack.c.l.b16 %v239
        %v432 = vunpack.c.l.b16 %v240
        %v433 = vunpack.c.l.b16 %v241
        %v434 = vunpack.c.l.b16 %v242
        %v435 = vunpack.c.l.b16 %v243
        %v436 = vunpack.c.l.b16 %v244
        %v437 = vunpack.c.l.b16 %v245
        %v438 = vunpack.c.l.b16 %v246
        %v439 = vunpack.c.l.b16 %v247
        %v440 = vunpack.c.l.b16 %v248
        %v441 = vunpack.c.l.b16 %v249
        %v442 = vunpack.c.l.b16 %v250
        %v443 = vunpack.c.l.b16 %v251
        %v444 = vunpack.c.l.b16 %v252
        %v445 = vunpack.c.l.b16 %v253
        %v446 = vunpack.c.l.b16 %v254
        %v447 = vunpack.c.l.b16 %v255
        %v448 = vpack.c.b16 %v417, %v416
        %v449 = vpack.c.b16 %v419, %v418
        %v450 = vpack.c.b16 %v421, %v420
        %v451 = vpack.c.b16 %v423, %v422
        %v452 = vpack.c.b16 %v425, %v424
        %v453 = vpack.c.b16 %v427, %v426
        %v454 = vpack.c.b16 %v429, %v428
        %v455 = vpack.c.b16 %v431, %v430
        %v456 = vpack.c.b16 %v433, %v432
        %v457 = vpack.c.b16 %v435, %v434
        %v458 = vpack.c.b16 %v437, %v436
        %v459 = vpack.c.b16 %v439, %v438
        %v460 = vpack.c.b16 %v441, %v440
        %v461 = vpack.c.b16 %v443, %v442
        %v462 = vpack.c.b16 %v445, %v444
        %v463 = vpack.c.b16 %v447, %v446
        %480 = vmatpush.bf16.xpose.msra.mxu0 %v455
        %481 = vmatpush.bf16.xpose.msra.mxu0 %v454
        %482 = vmatpush.bf16.xpose.msra.mxu0 %v453
        %483 = vmatpush.bf16.xpose.msra.mxu0 %v452
        %484 = vmatpush.bf16.xpose.msra.mxu0 %v451
        %485 = vmatpush.bf16.xpose.msra.mxu0 %v450
        %486 = vmatpush.bf16.xpose.msra.mxu0 %v449
        %487 = vmatpush.bf16.xpose.msra.mxu0 %v448
        %488 = vmatmul.bf16.gmra.mxu0 %v352
        %v489 = vpop.f32.mrf.mxu0
        %v490 = vadd.f32 0.0, %v489
        %v491 = vpop.f32.mrf.mxu0
        %v492 = vadd.f32 0.0, %v491
        %493 = vmatmul.bf16.gmra.mxu0 %v353
        %v494 = vpop.f32.mrf.mxu0
        %v495 = vadd.f32 0.0, %v494
        %v496 = vpop.f32.mrf.mxu0
        %v497 = vadd.f32 0.0, %v496
        %498 = vmatmul.bf16.gmra.mxu0 %v354
        %v499 = vpop.f32.mrf.mxu0
        %v500 = vadd.f32 0.0, %v499
        %v501 = vpop.f32.mrf.mxu0
        %v502 = vadd.f32 0.0, %v501
        %503 = vmatmul.bf16.gmra.mxu0 %v355
        %v504 = vpop.f32.mrf.mxu0
        %v505 = vadd.f32 0.0, %v504
        %v506 = vpop.f32.mrf.mxu0
        %v507 = vadd.f32 0.0, %v506
        %508 = vmatmul.bf16.gmra.mxu0 %v356
        %v509 = vpop.f32.mrf.mxu0
        %v510 = vadd.f32 0.0, %v509
        %v511 = vpop.f32.mrf.mxu0
        %v512 = vadd.f32 0.0, %v511
        %513 = vmatmul.bf16.gmra.mxu0 %v357
        %v514 = vpop.f32.mrf.mxu0
        %v515 = vadd.f32 0.0, %v514
        %v516 = vpop.f32.mrf.mxu0
        %v517 = vadd.f32 0.0, %v516
        %518 = vmatmul.bf16.gmra.mxu0 %v358
        %v519 = vpop.f32.mrf.mxu0
        %v520 = vadd.f32 0.0, %v519
        %v521 = vpop.f32.mrf.mxu0
        %v522 = vadd.f32 0.0, %v521
        %523 = vmatmul.bf16.gmra.mxu0 %v359
        %v524 = vpop.f32.mrf.mxu0
        %v525 = vadd.f32 0.0, %v524
        %v526 = vpop.f32.mrf.mxu0
        %v527 = vadd.f32 0.0, %v526
        %528 = vmatmul.bf16.gmra.mxu0 %v360
        %v529 = vpop.f32.mrf.mxu0
        %v530 = vadd.f32 0.0, %v529
        %v531 = vpop.f32.mrf.mxu0
        %v532 = vadd.f32 0.0, %v531
        %533 = vmatmul.bf16.gmra.mxu0 %v361
        %v534 = vpop.f32.mrf.mxu0
        %v535 = vadd.f32 0.0, %v534
        %v536 = vpop.f32.mrf.mxu0
        %v537 = vadd.f32 0.0, %v536
        %538 = vmatmul.bf16.gmra.mxu0 %v362
        %v539 = vpop.f32.mrf.mxu0
        %v540 = vadd.f32 0.0, %v539
        %v541 = vpop.f32.mrf.mxu0
        %v542 = vadd.f32 0.0, %v541
        %543 = vmatmul.bf16.gmra.mxu0 %v363
        %v544 = vpop.f32.mrf.mxu0
        %v545 = vadd.f32 0.0, %v544
        %v546 = vpop.f32.mrf.mxu0
        %v547 = vadd.f32 0.0, %v546
        %548 = vmatmul.bf16.gmra.mxu0 %v364
        %v549 = vpop.f32.mrf.mxu0
        %v550 = vadd.f32 0.0, %v549
        %v551 = vpop.f32.mrf.mxu0
        %v552 = vadd.f32 0.0, %v551
        %553 = vmatmul.bf16.gmra.mxu0 %v365
        %v554 = vpop.f32.mrf.mxu0
        %v555 = vadd.f32 0.0, %v554
        %v556 = vpop.f32.mrf.mxu0
        %v557 = vadd.f32 0.0, %v556
        %558 = vmatmul.bf16.gmra.mxu0 %v366
        %v559 = vpop.f32.mrf.mxu0
        %v560 = vadd.f32 0.0, %v559
        %v561 = vpop.f32.mrf.mxu0
        %v562 = vadd.f32 0.0, %v561
        %563 = vmatmul.bf16.gmra.mxu0 %v367
        %v564 = vpop.f32.mrf.mxu0
        %v565 = vadd.f32 0.0, %v564
        %v566 = vpop.f32.mrf.mxu0
        %v567 = vadd.f32 0.0, %v566
        %568 = vdwg.mxu0
        %569 = vmatpush.bf16.xpose.msra.mxu0 %v463
        %570 = vmatpush.bf16.xpose.msra.mxu0 %v462
        %571 = vmatpush.bf16.xpose.msra.mxu0 %v461
        %572 = vmatpush.bf16.xpose.msra.mxu0 %v460
        %573 = vmatpush.bf16.xpose.msra.mxu0 %v459
        %574 = vmatpush.bf16.xpose.msra.mxu0 %v458
        %575 = vmatpush.bf16.xpose.msra.mxu0 %v457
        %576 = vmatpush.bf16.xpose.msra.mxu0 %v456
        %577 = vmatmul.bf16.gmra.mxu0 %v352
        %v578 = vpop.f32.mrf.mxu0
        %v579 = vadd.f32 0.0, %v578
        %v580 = vpop.f32.mrf.mxu0
        %v581 = vadd.f32 0.0, %v580
        %582 = vmatmul.bf16.gmra.mxu0 %v353
        %v583 = vpop.f32.mrf.mxu0
        %v584 = vadd.f32 0.0, %v583
        %v585 = vpop.f32.mrf.mxu0
        %v586 = vadd.f32 0.0, %v585
        %587 = vmatmul.bf16.gmra.mxu0 %v354
        %v588 = vpop.f32.mrf.mxu0
        %v589 = vadd.f32 0.0, %v588
        %v590 = vpop.f32.mrf.mxu0
        %v591 = vadd.f32 0.0, %v590
        %592 = vmatmul.bf16.gmra.mxu0 %v355
        %v593 = vpop.f32.mrf.mxu0
        %v594 = vadd.f32 0.0, %v593
        %v595 = vpop.f32.mrf.mxu0
        %v596 = vadd.f32 0.0, %v595
        %597 = vmatmul.bf16.gmra.mxu0 %v356
        %v598 = vpop.f32.mrf.mxu0
        %v599 = vadd.f32 0.0, %v598
        %v600 = vpop.f32.mrf.mxu0
        %v601 = vadd.f32 0.0, %v600
        %602 = vmatmul.bf16.gmra.mxu0 %v357
        %v603 = vpop.f32.mrf.mxu0
        %v604 = vadd.f32 0.0, %v603
        %v605 = vpop.f32.mrf.mxu0
        %v606 = vadd.f32 0.0, %v605
        %607 = vmatmul.bf16.gmra.mxu0 %v358
        %v608 = vpop.f32.mrf.mxu0
        %v609 = vadd.f32 0.0, %v608
        %v610 = vpop.f32.mrf.mxu0
        %v611 = vadd.f32 0.0, %v610
        %612 = vmatmul.bf16.gmra.mxu0 %v359
        %v613 = vpop.f32.mrf.mxu0
        %v614 = vadd.f32 0.0, %v613
        %v615 = vpop.f32.mrf.mxu0
        %v616 = vadd.f32 0.0, %v615
        %617 = vmatmul.bf16.gmra.mxu0 %v360
        %v618 = vpop.f32.mrf.mxu0
        %v619 = vadd.f32 0.0, %v618
        %v620 = vpop.f32.mrf.mxu0
        %v621 = vadd.f32 0.0, %v620
        %622 = vmatmul.bf16.gmra.mxu0 %v361
        %v623 = vpop.f32.mrf.mxu0
        %v624 = vadd.f32 0.0, %v623
        %v625 = vpop.f32.mrf.mxu0
        %v626 = vadd.f32 0.0, %v625
        %627 = vmatmul.bf16.gmra.mxu0 %v362
        %v628 = vpop.f32.mrf.mxu0
        %v629 = vadd.f32 0.0, %v628
        %v630 = vpop.f32.mrf.mxu0
        %v631 = vadd.f32 0.0, %v630
        %632 = vmatmul.bf16.gmra.mxu0 %v363
        %v633 = vpop.f32.mrf.mxu0
        %v634 = vadd.f32 0.0, %v633
        %v635 = vpop.f32.mrf.mxu0
        %v636 = vadd.f32 0.0, %v635
        %637 = vmatmul.bf16.gmra.mxu0 %v364
        %v638 = vpop.f32.mrf.mxu0
        %v639 = vadd.f32 0.0, %v638
        %v640 = vpop.f32.mrf.mxu0
        %v641 = vadd.f32 0.0, %v640
        %642 = vmatmul.bf16.gmra.mxu0 %v365
        %v643 = vpop.f32.mrf.mxu0
        %v644 = vadd.f32 0.0, %v643
        %v645 = vpop.f32.mrf.mxu0
        %v646 = vadd.f32 0.0, %v645
        %647 = vmatmul.bf16.gmra.mxu0 %v366
        %v648 = vpop.f32.mrf.mxu0
        %v649 = vadd.f32 0.0, %v648
        %v650 = vpop.f32.mrf.mxu0
        %v651 = vadd.f32 0.0, %v650
        %652 = vmatmul.bf16.gmra.mxu0 %v367
        %v653 = vpop.f32.mrf.mxu0
        %v654 = vadd.f32 0.0, %v653
        %v655 = vpop.f32.mrf.mxu0
        %v656 = vadd.f32 0.0, %v655
        %657 = vdwg.mxu0
        %p658 = scmp.eq.s32.totalorder %s22, 0
        // Predicated region
        $region37: #{context_extractor2.4} parent=31 // pred_check
          %p659 = pneg %p658
        $region38: #{context_extractor2.4} parent=31 // pred_check_branch
          %661 = sbr.rel (%p659) target = $region40
        $region39: #{context_extractor2.4} parent=31 // pred_region
          %vm662 = vcmask 7168
          %663 = vst.msk [vmem:[#allocation2] sm:$0xff] %vm662, 0.0
          %664 = vst.msk [vmem:[#allocation2 + $0x8] sm:$0xff] %vm662, 0.0
          %665 = vst.msk [vmem:[#allocation2 + $0x10] sm:$0xff] %vm662, 0.0
          %666 = vst.msk [vmem:[#allocation2 + $0x18] sm:$0xff] %vm662, 0.0
          %667 = vst.msk [vmem:[#allocation2 + $0x20] sm:$0xff] %vm662, 0.0
          %668 = vst.msk [vmem:[#allocation2 + $0x28] sm:$0xff] %vm662, 0.0
          %669 = vst.msk [vmem:[#allocation2 + $0x30] sm:$0xff] %vm662, 0.0
          %670 = vst.msk [vmem:[#allocation2 + $0x38] sm:$0xff] %vm662, 0.0
          %671 = vst.msk [vmem:[#allocation2 + $0x40] sm:$0xff] %vm662, 0.0
          %672 = vst.msk [vmem:[#allocation2 + $0x48] sm:$0xff] %vm662, 0.0
          %673 = vst.msk [vmem:[#allocation2 + $0x50] sm:$0xff] %vm662, 0.0
          %674 = vst.msk [vmem:[#allocation2 + $0x58] sm:$0xff] %vm662, 0.0
          %675 = vst.msk [vmem:[#allocation2 + $0x60] sm:$0xff] %vm662, 0.0
          %676 = vst.msk [vmem:[#allocation2 + $0x68] sm:$0xff] %vm662, 0.0
          %677 = vst.msk [vmem:[#allocation2 + $0x70] sm:$0xff] %vm662, 0.0
          %678 = vst.msk [vmem:[#allocation2 + $0x78] sm:$0xff] %vm662, 0.0
          %679 = vst.msk [vmem:[#allocation2 + $0x80] sm:$0xff] %vm662, 0.0
          %680 = vst.msk [vmem:[#allocation2 + $0x88] sm:$0xff] %vm662, 0.0
          %681 = vst.msk [vmem:[#allocation2 + $0x90] sm:$0xff] %vm662, 0.0
          %682 = vst.msk [vmem:[#allocation2 + $0x98] sm:$0xff] %vm662, 0.0
          %683 = vst.msk [vmem:[#allocation2 + $0xa0] sm:$0xff] %vm662, 0.0
          %684 = vst.msk [vmem:[#allocation2 + $0xa8] sm:$0xff] %vm662, 0.0
          %685 = vst.msk [vmem:[#allocation2 + $0xb0] sm:$0xff] %vm662, 0.0
          %686 = vst.msk [vmem:[#allocation2 + $0xb8] sm:$0xff] %vm662, 0.0
          %687 = vst.msk [vmem:[#allocation2 + $0xc0] sm:$0xff] %vm662, 0.0
          %688 = vst.msk [vmem:[#allocation2 + $0xc8] sm:$0xff] %vm662, 0.0
          %689 = vst.msk [vmem:[#allocation2 + $0xd0] sm:$0xff] %vm662, 0.0
          %690 = vst.msk [vmem:[#allocation2 + $0xd8] sm:$0xff] %vm662, 0.0
          %691 = vst.msk [vmem:[#allocation2 + $0xe0] sm:$0xff] %vm662, 0.0
          %692 = vst.msk [vmem:[#allocation2 + $0xe8] sm:$0xff] %vm662, 0.0
          %693 = vst.msk [vmem:[#allocation2 + $0xf0] sm:$0xff] %vm662, 0.0
          %694 = vst.msk [vmem:[#allocation2 + $0xf8] sm:$0xff] %vm662, 0.0
        $region40: #{context_extractor2.4} parent=31 // pred_fallthru
          _
        %v695 = vld [vmem:[#allocation2] sm:$0xff]
        %v696 = vld [vmem:[#allocation2 + $0x8] sm:$0xff]
        %v697 = vld [vmem:[#allocation2 + $0x10] sm:$0xff]
        %v698 = vld [vmem:[#allocation2 + $0x18] sm:$0xff]
        %v699 = vld [vmem:[#allocation2 + $0x20] sm:$0xff]
        %v700 = vld [vmem:[#allocation2 + $0x28] sm:$0xff]
        %v701 = vld [vmem:[#allocation2 + $0x30] sm:$0xff]
        %v702 = vld [vmem:[#allocation2 + $0x38] sm:$0xff]
        %v703 = vld [vmem:[#allocation2 + $0x40] sm:$0xff]
        %v704 = vld [vmem:[#allocation2 + $0x48] sm:$0xff]
        %v705 = vld [vmem:[#allocation2 + $0x50] sm:$0xff]
        %v706 = vld [vmem:[#allocation2 + $0x58] sm:$0xff]
        %v707 = vld [vmem:[#allocation2 + $0x60] sm:$0xff]
        %v708 = vld [vmem:[#allocation2 + $0x68] sm:$0xff]
        %v709 = vld [vmem:[#allocation2 + $0x70] sm:$0xff]
        %v710 = vld [vmem:[#allocation2 + $0x78] sm:$0xff]
        %v711 = vld [vmem:[#allocation2 + $0x80] sm:$0xff]
        %v712 = vld [vmem:[#allocation2 + $0x88] sm:$0xff]
        %v713 = vld [vmem:[#allocation2 + $0x90] sm:$0xff]
        %v714 = vld [vmem:[#allocation2 + $0x98] sm:$0xff]
        %v715 = vld [vmem:[#allocation2 + $0xa0] sm:$0xff]
        %v716 = vld [vmem:[#allocation2 + $0xa8] sm:$0xff]
        %v717 = vld [vmem:[#allocation2 + $0xb0] sm:$0xff]
        %v718 = vld [vmem:[#allocation2 + $0xb8] sm:$0xff]
        %v719 = vld [vmem:[#allocation2 + $0xc0] sm:$0xff]
        %v720 = vld [vmem:[#allocation2 + $0xc8] sm:$0xff]
        %v721 = vld [vmem:[#allocation2 + $0xd0] sm:$0xff]
        %v722 = vld [vmem:[#allocation2 + $0xd8] sm:$0xff]
        %v723 = vld [vmem:[#allocation2 + $0xe0] sm:$0xff]
        %v724 = vld [vmem:[#allocation2 + $0xe8] sm:$0xff]
        %v725 = vld [vmem:[#allocation2 + $0xf0] sm:$0xff]
        %v726 = vld [vmem:[#allocation2 + $0xf8] sm:$0xff]
        %v727 = vmax.f32 %v490, %v579
        %728 = vmax.xlane.f32.xlu0 %v727
        %v729 = vpop.xlane.xlu0 %728
        %v730 = vmax.f32 %v492, %v581
        %731 = vmax.xlane.f32.xlu0 %v730
        %v732 = vpop.xlane.xlu0 %731
        %v733 = vmax.f32 %v495, %v584
        %734 = vmax.xlane.f32.xlu0 %v733
        %v735 = vpop.xlane.xlu0 %734
        %v736 = vmax.f32 %v497, %v586
        %737 = vmax.xlane.f32.xlu0 %v736
        %v738 = vpop.xlane.xlu0 %737
        %v739 = vmax.f32 %v500, %v589
        %740 = vmax.xlane.f32.xlu0 %v739
        %v741 = vpop.xlane.xlu0 %740
        %v742 = vmax.f32 %v502, %v591
        %743 = vmax.xlane.f32.xlu0 %v742
        %v744 = vpop.xlane.xlu0 %743
        %v745 = vmax.f32 %v505, %v594
        %746 = vmax.xlane.f32.xlu0 %v745
        %v747 = vpop.xlane.xlu0 %746
        %v748 = vmax.f32 %v507, %v596
        %749 = vmax.xlane.f32.xlu0 %v748
        %v750 = vpop.xlane.xlu0 %749
        %v751 = vmax.f32 %v510, %v599
        %752 = vmax.xlane.f32.xlu0 %v751
        %v753 = vpop.xlane.xlu0 %752
        %v754 = vmax.f32 %v512, %v601
        %755 = vmax.xlane.f32.xlu0 %v754
        %v756 = vpop.xlane.xlu0 %755
        %v757 = vmax.f32 %v515, %v604
        %758 = vmax.xlane.f32.xlu0 %v757
        %v759 = vpop.xlane.xlu0 %758
        %v760 = vmax.f32 %v517, %v606
        %761 = vmax.xlane.f32.xlu0 %v760
        %v762 = vpop.xlane.xlu0 %761
        %v763 = vmax.f32 %v520, %v609
        %764 = vmax.xlane.f32.xlu0 %v763
        %v765 = vpop.xlane.xlu0 %764
        %v766 = vmax.f32 %v522, %v611
        %767 = vmax.xlane.f32.xlu0 %v766
        %v768 = vpop.xlane.xlu0 %767
        %v769 = vmax.f32 %v525, %v614
        %770 = vmax.xlane.f32.xlu0 %v769
        %v771 = vpop.xlane.xlu0 %770
        %v772 = vmax.f32 %v527, %v616
        %773 = vmax.xlane.f32.xlu0 %v772
        %v774 = vpop.xlane.xlu0 %773
        %v775 = vmax.f32 %v530, %v619
        %776 = vmax.xlane.f32.xlu0 %v775
        %v777 = vpop.xlane.xlu0 %776
        %v778 = vmax.f32 %v532, %v621
        %779 = vmax.xlane.f32.xlu0 %v778
        %v780 = vpop.xlane.xlu0 %779
        %v781 = vmax.f32 %v535, %v624
        %782 = vmax.xlane.f32.xlu0 %v781
        %v783 = vpop.xlane.xlu0 %782
        %v784 = vmax.f32 %v537, %v626
        %785 = vmax.xlane.f32.xlu0 %v784
        %v786 = vpop.xlane.xlu0 %785
        %v787 = vmax.f32 %v540, %v629
        %788 = vmax.xlane.f32.xlu0 %v787
        %v789 = vpop.xlane.xlu0 %788
        %v790 = vmax.f32 %v542, %v631
        %791 = vmax.xlane.f32.xlu0 %v790
        %v792 = vpop.xlane.xlu0 %791
        %v793 = vmax.f32 %v545, %v634
        %794 = vmax.xlane.f32.xlu0 %v793
        %v795 = vpop.xlane.xlu0 %794
        %v796 = vmax.f32 %v547, %v636
        %797 = vmax.xlane.f32.xlu0 %v796
        %v798 = vpop.xlane.xlu0 %797
        %v799 = vmax.f32 %v550, %v639
        %800 = vmax.xlane.f32.xlu0 %v799
        %v801 = vpop.xlane.xlu0 %800
        %v802 = vmax.f32 %v552, %v641
        %803 = vmax.xlane.f32.xlu0 %v802
        %v804 = vpop.xlane.xlu0 %803
        %v805 = vmax.f32 %v555, %v644
        %806 = vmax.xlane.f32.xlu0 %v805
        %v807 = vpop.xlane.xlu0 %806
        %v808 = vmax.f32 %v557, %v646
        %809 = vmax.xlane.f32.xlu0 %v808
        %v810 = vpop.xlane.xlu0 %809
        %v811 = vmax.f32 %v560, %v649
        %812 = vmax.xlane.f32.xlu0 %v811
        %v813 = vpop.xlane.xlu0 %812
        %v814 = vmax.f32 %v562, %v651
        %815 = vmax.xlane.f32.xlu0 %v814
        %v816 = vpop.xlane.xlu0 %815
        %v817 = vmax.f32 %v565, %v654
        %818 = vmax.xlane.f32.xlu0 %v817
        %v819 = vpop.xlane.xlu0 %818
        %v820 = vmax.f32 %v567, %v656
        %821 = vmax.xlane.f32.xlu0 %v820
        %v822 = vpop.xlane.xlu0 %821
        %v823 = vadd.f32 %v695, %v729
        %v824 = vadd.f32 %v696, %v732
        %v825 = vadd.f32 %v697, %v735
        %v826 = vadd.f32 %v698, %v738
        %v827 = vadd.f32 %v699, %v741
        %v828 = vadd.f32 %v700, %v744
        %v829 = vadd.f32 %v701, %v747
        %v830 = vadd.f32 %v702, %v750
        %v831 = vadd.f32 %v703, %v753
        %v832 = vadd.f32 %v704, %v756
        %v833 = vadd.f32 %v705, %v759
        %v834 = vadd.f32 %v706, %v762
        %v835 = vadd.f32 %v707, %v765
        %v836 = vadd.f32 %v708, %v768
        %v837 = vadd.f32 %v709, %v771
        %v838 = vadd.f32 %v710, %v774
        %v839 = vadd.f32 %v711, %v777
        %v840 = vadd.f32 %v712, %v780
        %v841 = vadd.f32 %v713, %v783
        %v842 = vadd.f32 %v714, %v786
        %v843 = vadd.f32 %v715, %v789
        %v844 = vadd.f32 %v716, %v792
        %v845 = vadd.f32 %v717, %v795
        %v846 = vadd.f32 %v718, %v798
        %v847 = vadd.f32 %v719, %v801
        %v848 = vadd.f32 %v720, %v804
        %v849 = vadd.f32 %v721, %v807
        %v850 = vadd.f32 %v722, %v810
        %v851 = vadd.f32 %v723, %v813
        %v852 = vadd.f32 %v724, %v816
        %v853 = vadd.f32 %v725, %v819
        %v854 = vadd.f32 %v726, %v822
        %vm855 = vcmask 7168
        %856 = vst.msk [vmem:[#allocation2] sm:$0xff] %vm855, %v823
        %857 = vst.msk [vmem:[#allocation2 + $0x8] sm:$0xff] %vm855, %v824
        %858 = vst.msk [vmem:[#allocation2 + $0x10] sm:$0xff] %vm855, %v825
        %859 = vst.msk [vmem:[#allocation2 + $0x18] sm:$0xff] %vm855, %v826
        %860 = vst.msk [vmem:[#allocation2 + $0x20] sm:$0xff] %vm855, %v827
        %861 = vst.msk [vmem:[#allocation2 + $0x28] sm:$0xff] %vm855, %v828
        %862 = vst.msk [vmem:[#allocation2 + $0x30] sm:$0xff] %vm855, %v829
        %863 = vst.msk [vmem:[#allocation2 + $0x38] sm:$0xff] %vm855, %v830
        %864 = vst.msk [vmem:[#allocation2 + $0x40] sm:$0xff] %vm855, %v831
        %865 = vst.msk [vmem:[#allocation2 + $0x48] sm:$0xff] %vm855, %v832
        %866 = vst.msk [vmem:[#allocation2 + $0x50] sm:$0xff] %vm855, %v833
        %867 = vst.msk [vmem:[#allocation2 + $0x58] sm:$0xff] %vm855, %v834
        %868 = vst.msk [vmem:[#allocation2 + $0x60] sm:$0xff] %vm855, %v835
        %869 = vst.msk [vmem:[#allocation2 + $0x68] sm:$0xff] %vm855, %v836
        %870 = vst.msk [vmem:[#allocation2 + $0x70] sm:$0xff] %vm855, %v837
        %871 = vst.msk [vmem:[#allocation2 + $0x78] sm:$0xff] %vm855, %v838
        %872 = vst.msk [vmem:[#allocation2 + $0x80] sm:$0xff] %vm855, %v839
        %873 = vst.msk [vmem:[#allocation2 + $0x88] sm:$0xff] %vm855, %v840
        %874 = vst.msk [vmem:[#allocation2 + $0x90] sm:$0xff] %vm855, %v841
        %875 = vst.msk [vmem:[#allocation2 + $0x98] sm:$0xff] %vm855, %v842
        %876 = vst.msk [vmem:[#allocation2 + $0xa0] sm:$0xff] %vm855, %v843
        %877 = vst.msk [vmem:[#allocation2 + $0xa8] sm:$0xff] %vm855, %v844
        %878 = vst.msk [vmem:[#allocation2 + $0xb0] sm:$0xff] %vm855, %v845
        %879 = vst.msk [vmem:[#allocation2 + $0xb8] sm:$0xff] %vm855, %v846
        %880 = vst.msk [vmem:[#allocation2 + $0xc0] sm:$0xff] %vm855, %v847
        %881 = vst.msk [vmem:[#allocation2 + $0xc8] sm:$0xff] %vm855, %v848
        %882 = vst.msk [vmem:[#allocation2 + $0xd0] sm:$0xff] %vm855, %v849
        %883 = vst.msk [vmem:[#allocation2 + $0xd8] sm:$0xff] %vm855, %v850
        %884 = vst.msk [vmem:[#allocation2 + $0xe0] sm:$0xff] %vm855, %v851
        %885 = vst.msk [vmem:[#allocation2 + $0xe8] sm:$0xff] %vm855, %v852
        %886 = vst.msk [vmem:[#allocation2 + $0xf0] sm:$0xff] %vm855, %v853
        %887 = vst.msk [vmem:[#allocation2 + $0xf8] sm:$0xff] %vm855, %v854
        %p888 = scmp.eq.s32.totalorder %s22, 1
        // Predicated region
        $region41: #{context_extractor2.4} parent=31 // pred_check
          %p889 = pneg %p888
        $region42: #{context_extractor2.4} parent=31 // pred_check_branch
          %891 = sbr.rel (%p889) target = $region44
        $region43: #{context_extractor2.4} parent=31 // pred_region
          %v892 = vld [vmem:[#allocation2] sm:$0xff]
          %v893 = vld [vmem:[#allocation2 + $0x8] sm:$0xff]
          %v894 = vld [vmem:[#allocation2 + $0x10] sm:$0xff]
          %v895 = vld [vmem:[#allocation2 + $0x18] sm:$0xff]
          %v896 = vld [vmem:[#allocation2 + $0x20] sm:$0xff]
          %v897 = vld [vmem:[#allocation2 + $0x28] sm:$0xff]
          %v898 = vld [vmem:[#allocation2 + $0x30] sm:$0xff]
          %v899 = vld [vmem:[#allocation2 + $0x38] sm:$0xff]
          %v900 = vld [vmem:[#allocation2 + $0x40] sm:$0xff]
          %v901 = vld [vmem:[#allocation2 + $0x48] sm:$0xff]
          %v902 = vld [vmem:[#allocation2 + $0x50] sm:$0xff]
          %v903 = vld [vmem:[#allocation2 + $0x58] sm:$0xff]
          %v904 = vld [vmem:[#allocation2 + $0x60] sm:$0xff]
          %v905 = vld [vmem:[#allocation2 + $0x68] sm:$0xff]
          %v906 = vld [vmem:[#allocation2 + $0x70] sm:$0xff]
          %v907 = vld [vmem:[#allocation2 + $0x78] sm:$0xff]
          %v908 = vld [vmem:[#allocation2 + $0x80] sm:$0xff]
          %v909 = vld [vmem:[#allocation2 + $0x88] sm:$0xff]
          %v910 = vld [vmem:[#allocation2 + $0x90] sm:$0xff]
          %v911 = vld [vmem:[#allocation2 + $0x98] sm:$0xff]
          %v912 = vld [vmem:[#allocation2 + $0xa0] sm:$0xff]
          %v913 = vld [vmem:[#allocation2 + $0xa8] sm:$0xff]
          %v914 = vld [vmem:[#allocation2 + $0xb0] sm:$0xff]
          %v915 = vld [vmem:[#allocation2 + $0xb8] sm:$0xff]
          %v916 = vld [vmem:[#allocation2 + $0xc0] sm:$0xff]
          %v917 = vld [vmem:[#allocation2 + $0xc8] sm:$0xff]
          %v918 = vld [vmem:[#allocation2 + $0xd0] sm:$0xff]
          %v919 = vld [vmem:[#allocation2 + $0xd8] sm:$0xff]
          %v920 = vld [vmem:[#allocation2 + $0xe0] sm:$0xff]
          %v921 = vld [vmem:[#allocation2 + $0xe8] sm:$0xff]
          %v922 = vld [vmem:[#allocation2 + $0xf0] sm:$0xff]
          %v923 = vld [vmem:[#allocation2 + $0xf8] sm:$0xff]
          %v924 = vmul.f32 %v892, 0.044194173
          %v925 = vmul.f32 %v893, 0.044194173
          %v926 = vmul.f32 %v894, 0.044194173
          %v927 = vmul.f32 %v895, 0.044194173
          %v928 = vmul.f32 %v896, 0.044194173
          %v929 = vmul.f32 %v897, 0.044194173
          %v930 = vmul.f32 %v898, 0.044194173
          %v931 = vmul.f32 %v899, 0.044194173
          %v932 = vmul.f32 %v900, 0.044194173
          %v933 = vmul.f32 %v901, 0.044194173
          %v934 = vmul.f32 %v902, 0.044194173
          %v935 = vmul.f32 %v903, 0.044194173
          %v936 = vmul.f32 %v904, 0.044194173
          %v937 = vmul.f32 %v905, 0.044194173
          %v938 = vmul.f32 %v906, 0.044194173
          %v939 = vmul.f32 %v907, 0.044194173
          %v940 = vmul.f32 %v908, 0.044194173
          %v941 = vmul.f32 %v909, 0.044194173
          %v942 = vmul.f32 %v910, 0.044194173
          %v943 = vmul.f32 %v911, 0.044194173
          %v944 = vmul.f32 %v912, 0.044194173
          %v945 = vmul.f32 %v913, 0.044194173
          %v946 = vmul.f32 %v914, 0.044194173
          %v947 = vmul.f32 %v915, 0.044194173
          %v948 = vmul.f32 %v916, 0.044194173
          %v949 = vmul.f32 %v917, 0.044194173
          %v950 = vmul.f32 %v918, 0.044194173
          %v951 = vmul.f32 %v919, 0.044194173
          %v952 = vmul.f32 %v920, 0.044194173
          %v953 = vmul.f32 %v921, 0.044194173
          %v954 = vmul.f32 %v922, 0.044194173
          %v955 = vmul.f32 %v923, 0.044194173
          %v956 = vsel %vm855, %v924, -inf
          %v957 = vsel %vm855, %v925, -inf
          %v958 = vsel %vm855, %v926, -inf
          %v959 = vsel %vm855, %v927, -inf
          %v960 = vsel %vm855, %v928, -inf
          %v961 = vmax.f32 %v956, %v960
          %v962 = vsel %vm855, %v929, -inf
          %v963 = vmax.f32 %v957, %v962
          %v964 = vsel %vm855, %v930, -inf
          %v965 = vmax.f32 %v958, %v964
          %v966 = vsel %vm855, %v931, -inf
          %v967 = vmax.f32 %v959, %v966
          %v968 = vsel %vm855, %v932, -inf
          %v969 = vmax.f32 %v961, %v968
          %v970 = vsel %vm855, %v933, -inf
          %v971 = vmax.f32 %v963, %v970
          %v972 = vsel %vm855, %v934, -inf
          %v973 = vmax.f32 %v965, %v972
          %v974 = vsel %vm855, %v935, -inf
          %v975 = vmax.f32 %v967, %v974
          %v976 = vsel %vm855, %v936, -inf
          %v977 = vmax.f32 %v969, %v976
          %v978 = vsel %vm855, %v937, -inf
          %v979 = vmax.f32 %v971, %v978
          %v980 = vsel %vm855, %v938, -inf
          %v981 = vmax.f32 %v973, %v980
          %v982 = vsel %vm855, %v939, -inf
          %v983 = vmax.f32 %v975, %v982
          %v984 = vsel %vm855, %v940, -inf
          %v985 = vmax.f32 %v977, %v984
          %v986 = vsel %vm855, %v941, -inf
          %v987 = vmax.f32 %v979, %v986
          %v988 = vsel %vm855, %v942, -inf
          %v989 = vmax.f32 %v981, %v988
          %v990 = vsel %vm855, %v943, -inf
          %v991 = vmax.f32 %v983, %v990
          %v992 = vsel %vm855, %v944, -inf
          %v993 = vmax.f32 %v985, %v992
          %v994 = vsel %vm855, %v945, -inf
          %v995 = vmax.f32 %v987, %v994
          %v996 = vsel %vm855, %v946, -inf
          %v997 = vmax.f32 %v989, %v996
          %v998 = vsel %vm855, %v947, -inf
          %v999 = vmax.f32 %v991, %v998
          %v1000 = vsel %vm855, %v948, -inf
          %v1001 = vmax.f32 %v993, %v1000
          %v1002 = vsel %vm855, %v949, -inf
          %v1003 = vmax.f32 %v995, %v1002
          %v1004 = vsel %vm855, %v950, -inf
          %v1005 = vmax.f32 %v997, %v1004
          %v1006 = vsel %vm855, %v951, -inf
          %v1007 = vmax.f32 %v999, %v1006
          %v1008 = vsel %vm855, %v952, -inf
          %v1009 = vmax.f32 %v1001, %v1008
          %v1010 = vsel %vm855, %v953, -inf
          %v1011 = vmax.f32 %v1003, %v1010
          %v1012 = vsel %vm855, %v954, -inf
          %v1013 = vmax.f32 %v1005, %v1012
          %v1014 = vsel %vm855, %v955, -inf
          %v1015 = vmax.f32 %v1007, %v1014
          %v1016 = vmax.f32 %v1009, %v1011
          %v1017 = vmax.f32 %v1013, %v1015
          %v1018 = vmax.f32 %v1016, %v1017
          %v1019 = vrot.slane %v1018, 4
          %v1020 = vmax.f32 %v1018, %v1019
          %v1021 = vrot.slane %v1020, 2
          %v1022 = vmax.f32 %v1020, %v1021
          %v1023 = vrot.slane %v1022, 1
          %v1024 = vmax.f32 %v1022, %v1023
          %v1025 = vsub.f32 %v924, %v1024
          %v1026 = vsub.f32 %v925, %v1024
          %v1027 = vsub.f32 %v926, %v1024
          %v1028 = vsub.f32 %v927, %v1024
          %v1029 = vsub.f32 %v928, %v1024
          %v1030 = vsub.f32 %v929, %v1024
          %v1031 = vsub.f32 %v930, %v1024
          %v1032 = vsub.f32 %v931, %v1024
          %v1033 = vsub.f32 %v932, %v1024
          %v1034 = vsub.f32 %v933, %v1024
          %v1035 = vsub.f32 %v934, %v1024
          %v1036 = vsub.f32 %v935, %v1024
          %v1037 = vsub.f32 %v936, %v1024
          %v1038 = vsub.f32 %v937, %v1024
          %v1039 = vsub.f32 %v938, %v1024
          %v1040 = vsub.f32 %v939, %v1024
          %v1041 = vsub.f32 %v940, %v1024
          %v1042 = vsub.f32 %v941, %v1024
          %v1043 = vsub.f32 %v942, %v1024
          %v1044 = vsub.f32 %v943, %v1024
          %v1045 = vsub.f32 %v944, %v1024
          %v1046 = vsub.f32 %v945, %v1024
          %v1047 = vsub.f32 %v946, %v1024
          %v1048 = vsub.f32 %v947, %v1024
          %v1049 = vsub.f32 %v948, %v1024
          %v1050 = vsub.f32 %v949, %v1024
          %v1051 = vsub.f32 %v950, %v1024
          %v1052 = vsub.f32 %v951, %v1024
          %v1053 = vsub.f32 %v952, %v1024
          %v1054 = vsub.f32 %v953, %v1024
          %v1055 = vsub.f32 %v954, %v1024
          %v1056 = vsub.f32 %v955, %v1024
          %v1057 = vmul.f32 %v1025, 1.442695
          %v1058 = vpow.pop %v1057
          %v1059 = vmul.f32 %v1026, 1.442695
          %v1060 = vpow.pop %v1059
          %v1061 = vmul.f32 %v1027, 1.442695
          %v1062 = vpow.pop %v1061
          %v1063 = vmul.f32 %v1028, 1.442695
          %v1064 = vpow.pop %v1063
          %v1065 = vmul.f32 %v1029, 1.442695
          %v1066 = vpow.pop %v1065
          %v1067 = vmul.f32 %v1030, 1.442695
          %v1068 = vpow.pop %v1067
          %v1069 = vmul.f32 %v1031, 1.442695
          %v1070 = vpow.pop %v1069
          %v1071 = vmul.f32 %v1032, 1.442695
          %v1072 = vpow.pop %v1071
          %v1073 = vmul.f32 %v1033, 1.442695
          %v1074 = vpow.pop %v1073
          %v1075 = vmul.f32 %v1034, 1.442695
          %v1076 = vpow.pop %v1075
          %v1077 = vmul.f32 %v1035, 1.442695
          %v1078 = vpow.pop %v1077
          %v1079 = vmul.f32 %v1036, 1.442695
          %v1080 = vpow.pop %v1079
          %v1081 = vmul.f32 %v1037, 1.442695
          %v1082 = vpow.pop %v1081
          %v1083 = vmul.f32 %v1038, 1.442695
          %v1084 = vpow.pop %v1083
          %v1085 = vmul.f32 %v1039, 1.442695
          %v1086 = vpow.pop %v1085
          %v1087 = vmul.f32 %v1040, 1.442695
          %v1088 = vpow.pop %v1087
          %v1089 = vmul.f32 %v1041, 1.442695
          %v1090 = vpow.pop %v1089
          %v1091 = vmul.f32 %v1042, 1.442695
          %v1092 = vpow.pop %v1091
          %v1093 = vmul.f32 %v1043, 1.442695
          %v1094 = vpow.pop %v1093
          %v1095 = vmul.f32 %v1044, 1.442695
          %v1096 = vpow.pop %v1095
          %v1097 = vmul.f32 %v1045, 1.442695
          %v1098 = vpow.pop %v1097
          %v1099 = vmul.f32 %v1046, 1.442695
          %v1100 = vpow.pop %v1099
          %v1101 = vmul.f32 %v1047, 1.442695
          %v1102 = vpow.pop %v1101
          %v1103 = vmul.f32 %v1048, 1.442695
          %v1104 = vpow.pop %v1103
          %v1105 = vmul.f32 %v1049, 1.442695
          %v1106 = vpow.pop %v1105
          %v1107 = vmul.f32 %v1050, 1.442695
          %v1108 = vpow.pop %v1107
          %v1109 = vmul.f32 %v1051, 1.442695
          %v1110 = vpow.pop %v1109
          %v1111 = vmul.f32 %v1052, 1.442695
          %v1112 = vpow.pop %v1111
          %v1113 = vmul.f32 %v1053, 1.442695
          %v1114 = vpow.pop %v1113
          %v1115 = vmul.f32 %v1054, 1.442695
          %v1116 = vpow.pop %v1115
          %v1117 = vmul.f32 %v1055, 1.442695
          %v1118 = vpow.pop %v1117
          %v1119 = vmul.f32 %v1056, 1.442695
          %v1120 = vpow.pop %v1119
          %v1121 = vsel %vm855, %v1058, 0.0
          %v1122 = vsel %vm855, %v1060, 0.0
          %v1123 = vadd.f32 %v1121, %v1122
          %v1124 = vsel %vm855, %v1062, 0.0
          %v1125 = vadd.f32 %v1123, %v1124
          %v1126 = vsel %vm855, %v1064, 0.0
          %v1127 = vadd.f32 %v1125, %v1126
          %v1128 = vsel %vm855, %v1066, 0.0
          %v1129 = vadd.f32 %v1127, %v1128
          %v1130 = vsel %vm855, %v1068, 0.0
          %v1131 = vadd.f32 %v1129, %v1130
          %v1132 = vsel %vm855, %v1070, 0.0
          %v1133 = vadd.f32 %v1131, %v1132
          %v1134 = vsel %vm855, %v1072, 0.0
          %v1135 = vadd.f32 %v1133, %v1134
          %v1136 = vsel %vm855, %v1074, 0.0
          %v1137 = vadd.f32 %v1135, %v1136
          %v1138 = vsel %vm855, %v1076, 0.0
          %v1139 = vadd.f32 %v1137, %v1138
          %v1140 = vsel %vm855, %v1078, 0.0
          %v1141 = vadd.f32 %v1139, %v1140
          %v1142 = vsel %vm855, %v1080, 0.0
          %v1143 = vadd.f32 %v1141, %v1142
          %v1144 = vsel %vm855, %v1082, 0.0
          %v1145 = vadd.f32 %v1143, %v1144
          %v1146 = vsel %vm855, %v1084, 0.0
          %v1147 = vadd.f32 %v1145, %v1146
          %v1148 = vsel %vm855, %v1086, 0.0
          %v1149 = vadd.f32 %v1147, %v1148
          %v1150 = vsel %vm855, %v1088, 0.0
          %v1151 = vadd.f32 %v1149, %v1150
          %v1152 = vsel %vm855, %v1090, 0.0
          %v1153 = vadd.f32 %v1151, %v1152
          %v1154 = vsel %vm855, %v1092, 0.0
          %v1155 = vadd.f32 %v1153, %v1154
          %v1156 = vsel %vm855, %v1094, 0.0
          %v1157 = vadd.f32 %v1155, %v1156
          %v1158 = vsel %vm855, %v1096, 0.0
          %v1159 = vadd.f32 %v1157, %v1158
          %v1160 = vsel %vm855, %v1098, 0.0
          %v1161 = vadd.f32 %v1159, %v1160
          %v1162 = vsel %vm855, %v1100, 0.0
          %v1163 = vadd.f32 %v1161, %v1162
          %v1164 = vsel %vm855, %v1102, 0.0
          %v1165 = vadd.f32 %v1163, %v1164
          %v1166 = vsel %vm855, %v1104, 0.0
          %v1167 = vadd.f32 %v1165, %v1166
          %v1168 = vsel %vm855, %v1106, 0.0
          %v1169 = vadd.f32 %v1167, %v1168
          %v1170 = vsel %vm855, %v1108, 0.0
          %v1171 = vadd.f32 %v1169, %v1170
          %v1172 = vsel %vm855, %v1110, 0.0
          %v1173 = vadd.f32 %v1171, %v1172
          %v1174 = vsel %vm855, %v1112, 0.0
          %v1175 = vadd.f32 %v1173, %v1174
          %v1176 = vsel %vm855, %v1114, 0.0
          %v1177 = vadd.f32 %v1175, %v1176
          %v1178 = vsel %vm855, %v1116, 0.0
          %v1179 = vadd.f32 %v1177, %v1178
          %v1180 = vsel %vm855, %v1118, 0.0
          %v1181 = vadd.f32 %v1179, %v1180
          %v1182 = vsel %vm855, %v1120, 0.0
          %v1183 = vadd.f32 %v1181, %v1182
          %v1184 = vrot.slane %v1183, 4
          %v1185 = vadd.f32 %v1183, %v1184
          %v1186 = vrot.slane %v1185, 2
          %v1187 = vadd.f32 %v1185, %v1186
          %v1188 = vrot.slane %v1187, 1
          %v1189 = vadd.f32 %v1187, %v1188
          %v1190 = vrcp.pop %v1189
          %v1191 = vmul.f32 %v1058, %v1190
          %v1192 = vmul.f32 %v1060, %v1190
          %v1193 = vmul.f32 %v1062, %v1190
          %v1194 = vmul.f32 %v1064, %v1190
          %v1195 = vmul.f32 %v1066, %v1190
          %v1196 = vmul.f32 %v1068, %v1190
          %v1197 = vmul.f32 %v1070, %v1190
          %v1198 = vmul.f32 %v1072, %v1190
          %v1199 = vmul.f32 %v1074, %v1190
          %v1200 = vmul.f32 %v1076, %v1190
          %v1201 = vmul.f32 %v1078, %v1190
          %v1202 = vmul.f32 %v1080, %v1190
          %v1203 = vmul.f32 %v1082, %v1190
          %v1204 = vmul.f32 %v1084, %v1190
          %v1205 = vmul.f32 %v1086, %v1190
          %v1206 = vmul.f32 %v1088, %v1190
          %v1207 = vmul.f32 %v1090, %v1190
          %v1208 = vmul.f32 %v1092, %v1190
          %v1209 = vmul.f32 %v1094, %v1190
          %v1210 = vmul.f32 %v1096, %v1190
          %v1211 = vmul.f32 %v1098, %v1190
          %v1212 = vmul.f32 %v1100, %v1190
          %v1213 = vmul.f32 %v1102, %v1190
          %v1214 = vmul.f32 %v1104, %v1190
          %v1215 = vmul.f32 %v1106, %v1190
          %v1216 = vmul.f32 %v1108, %v1190
          %v1217 = vmul.f32 %v1110, %v1190
          %v1218 = vmul.f32 %v1112, %v1190
          %v1219 = vmul.f32 %v1114, %v1190
          %v1220 = vmul.f32 %v1116, %v1190
          %v1221 = vmul.f32 %v1118, %v1190
          %v1222 = vmul.f32 %v1120, %v1190
          %v1223 = vld [vmem:[%s186] sm:$0xff]
          %v1224 = vld [vmem:[%s186 + $0x8] sm:$0xff]
          %v1225 = vld [vmem:[%s186 + $0x10] sm:$0xff]
          %v1226 = vld [vmem:[%s186 + $0x18] sm:$0xff]
          %v1227 = vld [vmem:[%s186 + $0x20] sm:$0xff]
          %v1228 = vld [vmem:[%s186 + $0x28] sm:$0xff]
          %v1229 = vld [vmem:[%s186 + $0x30] sm:$0xff]
          %v1230 = vld [vmem:[%s186 + $0x38] sm:$0xff]
          %v1231 = vld [vmem:[%s186 + $0x40] sm:$0xff]
          %v1232 = vld [vmem:[%s186 + $0x48] sm:$0xff]
          %v1233 = vld [vmem:[%s186 + $0x50] sm:$0xff]
          %v1234 = vld [vmem:[%s186 + $0x58] sm:$0xff]
          %v1235 = vld [vmem:[%s186 + $0x60] sm:$0xff]
          %v1236 = vld [vmem:[%s186 + $0x68] sm:$0xff]
          %v1237 = vld [vmem:[%s186 + $0x70] sm:$0xff]
          %v1238 = vld [vmem:[%s186 + $0x78] sm:$0xff]
          %v1239 = vld [vmem:[%s186 + $0x80] sm:$0xff]
          %v1240 = vld [vmem:[%s186 + $0x88] sm:$0xff]
          %v1241 = vld [vmem:[%s186 + $0x90] sm:$0xff]
          %v1242 = vld [vmem:[%s186 + $0x98] sm:$0xff]
          %v1243 = vld [vmem:[%s186 + $0xa0] sm:$0xff]
          %v1244 = vld [vmem:[%s186 + $0xa8] sm:$0xff]
          %v1245 = vld [vmem:[%s186 + $0xb0] sm:$0xff]
          %v1246 = vld [vmem:[%s186 + $0xb8] sm:$0xff]
          %v1247 = vld [vmem:[%s186 + $0xc0] sm:$0xff]
          %v1248 = vld [vmem:[%s186 + $0xc8] sm:$0xff]
          %v1249 = vld [vmem:[%s186 + $0xd0] sm:$0xff]
          %v1250 = vld [vmem:[%s186 + $0xd8] sm:$0xff]
          %v1251 = vld [vmem:[%s186 + $0xe0] sm:$0xff]
          %v1252 = vld [vmem:[%s186 + $0xe8] sm:$0xff]
          %v1253 = vld [vmem:[%s186 + $0xf0] sm:$0xff]
          %v1254 = vld [vmem:[%s186 + $0xf8] sm:$0xff]
          %1256 = vset.pattern.permute.xlu0 0
          %1257 = vperm.xlu0 %1256, %v1191
          %v1258 = vpop.permute.xlu0 %1257
          %1261 = vset.pattern.permute.xlu0 0
          %1262 = vperm.xlu0 %1261, %v1192
          %v1263 = vpop.permute.xlu0 %1262
          %1266 = vset.pattern.permute.xlu0 0
          %1267 = vperm.xlu0 %1266, %v1193
          %v1268 = vpop.permute.xlu0 %1267
          %1271 = vset.pattern.permute.xlu0 0
          %1272 = vperm.xlu0 %1271, %v1194
          %v1273 = vpop.permute.xlu0 %1272
          %1276 = vset.pattern.permute.xlu0 0
          %1277 = vperm.xlu0 %1276, %v1195
          %v1278 = vpop.permute.xlu0 %1277
          %1281 = vset.pattern.permute.xlu0 0
          %1282 = vperm.xlu0 %1281, %v1196
          %v1283 = vpop.permute.xlu0 %1282
          %1286 = vset.pattern.permute.xlu0 0
          %1287 = vperm.xlu0 %1286, %v1197
          %v1288 = vpop.permute.xlu0 %1287
          %1291 = vset.pattern.permute.xlu0 0
          %1292 = vperm.xlu0 %1291, %v1198
          %v1293 = vpop.permute.xlu0 %1292
          %1296 = vset.pattern.permute.xlu0 0
          %1297 = vperm.xlu0 %1296, %v1199
          %v1298 = vpop.permute.xlu0 %1297
          %1301 = vset.pattern.permute.xlu0 0
          %1302 = vperm.xlu0 %1301, %v1200
          %v1303 = vpop.permute.xlu0 %1302
          %1306 = vset.pattern.permute.xlu0 0
          %1307 = vperm.xlu0 %1306, %v1201
          %v1308 = vpop.permute.xlu0 %1307
          %1311 = vset.pattern.permute.xlu0 0
          %1312 = vperm.xlu0 %1311, %v1202
          %v1313 = vpop.permute.xlu0 %1312
          %1316 = vset.pattern.permute.xlu0 0
          %1317 = vperm.xlu0 %1316, %v1203
          %v1318 = vpop.permute.xlu0 %1317
          %1321 = vset.pattern.permute.xlu0 0
          %1322 = vperm.xlu0 %1321, %v1204
          %v1323 = vpop.permute.xlu0 %1322
          %1326 = vset.pattern.permute.xlu0 0
          %1327 = vperm.xlu0 %1326, %v1205
          %v1328 = vpop.permute.xlu0 %1327
          %1331 = vset.pattern.permute.xlu0 0
          %1332 = vperm.xlu0 %1331, %v1206
          %v1333 = vpop.permute.xlu0 %1332
          %1336 = vset.pattern.permute.xlu0 0
          %1337 = vperm.xlu0 %1336, %v1207
          %v1338 = vpop.permute.xlu0 %1337
          %1341 = vset.pattern.permute.xlu0 0
          %1342 = vperm.xlu0 %1341, %v1208
          %v1343 = vpop.permute.xlu0 %1342
          %1346 = vset.pattern.permute.xlu0 0
          %1347 = vperm.xlu0 %1346, %v1209
          %v1348 = vpop.permute.xlu0 %1347
          %1351 = vset.pattern.permute.xlu0 0
          %1352 = vperm.xlu0 %1351, %v1210
          %v1353 = vpop.permute.xlu0 %1352
          %1356 = vset.pattern.permute.xlu0 0
          %1357 = vperm.xlu0 %1356, %v1211
          %v1358 = vpop.permute.xlu0 %1357
          %1361 = vset.pattern.permute.xlu0 0
          %1362 = vperm.xlu0 %1361, %v1212
          %v1363 = vpop.permute.xlu0 %1362
          %1366 = vset.pattern.permute.xlu0 0
          %1367 = vperm.xlu0 %1366, %v1213
          %v1368 = vpop.permute.xlu0 %1367
          %1371 = vset.pattern.permute.xlu0 0
          %1372 = vperm.xlu0 %1371, %v1214
          %v1373 = vpop.permute.xlu0 %1372
          %1376 = vset.pattern.permute.xlu0 0
          %1377 = vperm.xlu0 %1376, %v1215
          %v1378 = vpop.permute.xlu0 %1377
          %1381 = vset.pattern.permute.xlu0 0
          %1382 = vperm.xlu0 %1381, %v1216
          %v1383 = vpop.permute.xlu0 %1382
          %1386 = vset.pattern.permute.xlu0 0
          %1387 = vperm.xlu0 %1386, %v1217
          %v1388 = vpop.permute.xlu0 %1387
          %1391 = vset.pattern.permute.xlu0 0
          %1392 = vperm.xlu0 %1391, %v1218
          %v1393 = vpop.permute.xlu0 %1392
          %1396 = vset.pattern.permute.xlu0 0
          %1397 = vperm.xlu0 %1396, %v1219
          %v1398 = vpop.permute.xlu0 %1397
          %1401 = vset.pattern.permute.xlu0 0
          %1402 = vperm.xlu0 %1401, %v1220
          %v1403 = vpop.permute.xlu0 %1402
          %1406 = vset.pattern.permute.xlu0 0
          %1407 = vperm.xlu0 %1406, %v1221
          %v1408 = vpop.permute.xlu0 %1407
          %1411 = vset.pattern.permute.xlu0 0
          %1412 = vperm.xlu0 %1411, %v1222
          %v1413 = vpop.permute.xlu0 %1412
          %v1415 = vmul.f32 %v1223, %v1258
          %v1416 = vmul.f32 %v1224, %v1263
          %v1417 = vmul.f32 %v1225, %v1268
          %v1418 = vmul.f32 %v1226, %v1273
          %v1419 = vmul.f32 %v1227, %v1278
          %v1420 = vmul.f32 %v1228, %v1283
          %v1421 = vmul.f32 %v1229, %v1288
          %v1422 = vmul.f32 %v1230, %v1293
          %v1423 = vmul.f32 %v1231, %v1298
          %v1424 = vmul.f32 %v1232, %v1303
          %v1425 = vmul.f32 %v1233, %v1308
          %v1426 = vmul.f32 %v1234, %v1313
          %v1427 = vmul.f32 %v1235, %v1318
          %v1428 = vmul.f32 %v1236, %v1323
          %v1429 = vmul.f32 %v1237, %v1328
          %v1430 = vmul.f32 %v1238, %v1333
          %v1431 = vmul.f32 %v1239, %v1338
          %v1432 = vmul.f32 %v1240, %v1343
          %v1433 = vmul.f32 %v1241, %v1348
          %v1434 = vmul.f32 %v1242, %v1353
          %v1435 = vmul.f32 %v1243, %v1358
          %v1436 = vmul.f32 %v1244, %v1363
          %v1437 = vmul.f32 %v1245, %v1368
          %v1438 = vmul.f32 %v1246, %v1373
          %v1439 = vmul.f32 %v1247, %v1378
          %v1440 = vmul.f32 %v1248, %v1383
          %v1441 = vmul.f32 %v1249, %v1388
          %v1442 = vmul.f32 %v1250, %v1393
          %v1443 = vmul.f32 %v1251, %v1398
          %v1444 = vmul.f32 %v1252, %v1403
          %v1445 = vmul.f32 %v1253, %v1408
          %v1446 = vmul.f32 %v1254, %v1413
          %v1447 = vadd.f32 %v1415, %v1416
          %v1448 = vadd.f32 %v1447, %v1417
          %v1449 = vadd.f32 %v1448, %v1418
          %v1450 = vadd.f32 %v1449, %v1419
          %v1451 = vadd.f32 %v1450, %v1420
          %v1452 = vadd.f32 %v1451, %v1421
          %v1453 = vadd.f32 %v1452, %v1422
          %v1454 = vadd.f32 %v1453, %v1423
          %v1455 = vadd.f32 %v1454, %v1424
          %v1456 = vadd.f32 %v1455, %v1425
          %v1457 = vadd.f32 %v1456, %v1426
          %v1458 = vadd.f32 %v1457, %v1427
          %v1459 = vadd.f32 %v1458, %v1428
          %v1460 = vadd.f32 %v1459, %v1429
          %v1461 = vadd.f32 %v1460, %v1430
          %v1462 = vadd.f32 %v1461, %v1431
          %v1463 = vadd.f32 %v1462, %v1432
          %v1464 = vadd.f32 %v1463, %v1433
          %v1465 = vadd.f32 %v1464, %v1434
          %v1466 = vadd.f32 %v1465, %v1435
          %v1467 = vadd.f32 %v1466, %v1436
          %v1468 = vadd.f32 %v1467, %v1437
          %v1469 = vadd.f32 %v1468, %v1438
          %v1470 = vadd.f32 %v1469, %v1439
          %v1471 = vadd.f32 %v1470, %v1440
          %v1472 = vadd.f32 %v1471, %v1441
          %v1473 = vadd.f32 %v1472, %v1442
          %v1474 = vadd.f32 %v1473, %v1443
          %v1475 = vadd.f32 %v1474, %v1444
          %v1476 = vadd.f32 %v1475, %v1445
          %v1477 = vadd.f32 %v1476, %v1446
          %v1478 = vrot.slane %v1477, 4
          %v1479 = vadd.f32 %v1477, %v1478
          %v1480 = vrot.slane %v1479, 2
          %v1481 = vadd.f32 %v1479, %v1480
          %v1482 = vrot.slane %v1481, 1
          %v1483 = vadd.f32 %v1481, %v1482
          %1484 = vst [vmem:[%s220] sm:$0x1] %v1483
        $region44: #{context_extractor2.4} parent=31 // pred_fallthru
          _
        %p1485 = scmp.lt.s32.totalorder %s21, 1
        %s1486 = scalar_select %p1485, %s21, 1
        %s1487 = scalar_lea.vmem %s3, %s1486
        // Predicated region
        $region45: #{context_extractor2.4} parent=31 // pred_check
          %p1488 = pneg %p120
        $region46: #{context_extractor2.4} parent=31 // pred_check_branch
          %1490 = sbr.rel (%p1488) target = $region48
        $region47: #{context_extractor2.4} parent=31 // pred_region
          _
        $region48: #{context_extractor2.4} parent=31 // pred_fallthru
          _
      $region32: #{context_extractor2.4} parent=5 // pred_fallthru
        _
      %p1491 = scmp.le.s32.totalorder 2, %s12
      // Predicated region
      $region49: #{context_extractor2.4} parent=5 // pred_check
        %p1492 = pneg %p1491
      $region50: #{context_extractor2.4} parent=5 // pred_check_branch
        %1494 = sbr.rel (%p1492) target = $region52
      $region51: #{context_extractor2.4} parent=5 // pred_region
        %s1495 = ssub.s32 %s12, 2
        // Predicated region
        $region53: #{context_extractor2.4} parent=51 // pred_check
          %p1496 = pneg %p126
        $region54: #{context_extractor2.4} parent=51 // pred_check_branch
          %1498 = sbr.rel (%p1496) target = $region56
        $region55: #{context_extractor2.4} parent=51 // pred_region
          %p1499 = scmp.lt.s32.totalorder %s23, 1
          %s1500 = scalar_select %p1499, %s23, 1
          %s1501 = scalar_lea.vmem %s3, %s1500
        $region56: #{context_extractor2.4} parent=51 // pred_fallthru
          _
      $region52: #{context_extractor2.4} parent=5 // pred_fallthru
        _
    $region6: #{context_extractor2.4} parent=1 // loop_footer
      %s16 = sadd.s32 1, %s12
    $region7: #{context_extractor2.4} parent=1 // loop_footer_branch
      %11 = sbr.rel target = $region3
    $region8: #{context_extractor2.4} parent=1 // loop_exit
      _
    %1502 = vsyncpa [#allocation4], 1
    %s1503 = scalar_lea.sflag [#allocation4], 1
    %1504 = vsyncpa %s1503, 1

</llo_original>
